<compile_context>
chip_gen: v6e
topology: v6e:2x2x1
jax: 0.10.0
libtpu: 0.0.40
codegen_flags: <defaults>
</compile_context>

<pallas_src>
import jax
import jax.numpy as jnp
import numpy as np
from jax import lax
from jax.experimental import pallas as pl
from jax.experimental.pallas import tpu as pltpu

# ---- synthetic config (mirrors LSTMClassifier.__init__ shapes) ----
INPUT_DIM = 8     # cfg.NUM_ALL_FEATURES
SPEC_DIM = 4      # cfg.NUM_CONTROL_FEATURES
OUTPUT_DIM = 3    # cfg.NUM_PRED_FEATURES
HIDDEN = 32       # args.d_model
NUM_LAYERS = 2    # args.e_layers (kernel hard-wires the 2-layer wavefront)
OUT_LEN = 4       # args.out_len

BATCH = 2
SEQ = 8
SPEC_LEN = 6

G = 4 * HIDDEN                     # 128: fused gate width, columns [i|f|o|g]
GENC = OUT_LEN * OUTPUT_DIM        # 12
ACT_COLS = max(INPUT_DIM, SPEC_DIM)
OUT_LANES = 128                    # single lane-dense output width

# Row layout of the packed f32 "post" weight buffer (width = G = 128 lanes).
ROW_LINW = 0                          # (HIDDEN, HIDDEN)   cols [0:HIDDEN]
ROW_SPECW = ROW_LINW + HIDDEN         # (SPEC_DIM, HIDDEN) cols [0:HIDDEN]
ROW_GENW = ROW_SPECW + 8              # (HIDDEN, GENC)     cols [0:GENC]
ROW_WIH0 = ROW_GENW + HIDDEN          # (INPUT_DIM, G)     cols [0:G]
ROW_LINB = ROW_WIH0 + INPUT_DIM       # (1, HIDDEN)
ROW_SPECB = ROW_LINB + 1              # (1, HIDDEN)
ROW_GENB = ROW_SPECB + 1              # (1, GENC)
ROW_B0 = ROW_GENB + 1                 # (1, G)
ROW_B1 = ROW_B0 + 1                   # (1, G)
WPOST_ROWS = ROW_B1 + 1

GATE_ORDER = (0, 1, 3, 2)             # per-gate (i, f, g, o) -> fused [i|f|o|g]


def lstm_classifier_kernel(act_ref, wrec_ref, wpost_ref, out_ref):
    B, S, Sp, H = BATCH, SEQ, SPEC_LEN, HIDDEN
    f32, bf16 = jnp.float32, jnp.bfloat16

    # ---- static slices of the packed buffers (3 entry DMAs total) ----
    whh = wrec_ref[...]                                          # (2H, 2G) bf16
    wih0 = wpost_ref[ROW_WIH0:ROW_WIH0 + INPUT_DIM, 0:G]         # (Din, G)
    b0 = wpost_ref[ROW_B0:ROW_B0 + 1, 0:G]
    b1 = wpost_ref[ROW_B1:ROW_B1 + 1, 0:G]
    lin_w = wpost_ref[ROW_LINW:ROW_LINW + H, 0:H]
    lin_b = wpost_ref[ROW_LINB:ROW_LINB + 1, 0:H]
    spec_w = wpost_ref[ROW_SPECW:ROW_SPECW + SPEC_DIM, 0:H]      # spec_dense @ lin folded
    spec_b = wpost_ref[ROW_SPECB:ROW_SPECB + 1, 0:H]
    gen_w = wpost_ref[ROW_GENW:ROW_GENW + H, 0:GENC]             # LN affine folded
    gen_b = wpost_ref[ROW_GENB:ROW_GENB + 1, 0:GENC]

    x = act_ref[0:S * B, 0:INPUT_DIM]                            # (S*B, Din)
    spec = act_ref[S * B:S * B + Sp * B, 0:SPEC_DIM]             # (Sp*B, Dsp)

    # ---- layer-0 input projection, hoisted out of the recurrence ----
    xproj = jnp.dot(x, wih0, preferred_element_type=f32) + b0    # (S*B, G)

    def cell(gates, c_prev):
        # gate columns [i|f|o|g]: one sigmoid over the 3H slab + one tanh on g
        # -> 3 EUP ops per step; all element-wise state stays f32.
        sig = jax.nn.sigmoid(gates[:, 0:3 * H])
        g_t = jnp.tanh(gates[:, 3 * H:4 * H])
        c = sig[:, H:2 * H] * c_prev + sig[:, 0:H] * g_t
        h = sig[:, 2 * H:3 * H] * jnp.tanh(c)
        return h, c

    # ---- wavefront over the 2 LSTM layers ----
    # Wave step k: layer 0 advances to time k, layer 1 to time k-1.  The single
    # combined matmul [h0_{k-1} | h1_{k-2}] @ [[Whh0, Wih1], [0, Whh1]] yields
    # both recurrent contributions, lane-dense (N = 256), bf16 MXU operands.
    # TODO(synk): nn.LSTM inter-layer dropout is training-only; omitted here.
    zero = jnp.zeros((B, H), f32)
    h0, c0 = cell(xproj[0:B, :], zero)          # wave 0: layer 0 @ t=0
    h1, c1 = zero, zero
    h1_ts = []
    for k in range(1, S + 1):                   # fully unrolled, S is small
        lhs = jnp.concatenate([h0, h1], axis=1).astype(bf16)     # (B, 2H)
        rec = jnp.dot(lhs, whh, preferred_element_type=f32)      # (B, 2G) f32
        # layer 1 @ t = k-1: h0_{k-1} @ Wih1 + h1_{k-2} @ Whh1 + b1
        h1, c1 = cell(rec[:, G:2 * G] + b1, c1)
        h1_ts.append(h1)
        # layer 0 @ t = k: xproj_k + h0_{k-1} @ Whh0
        if k < S:
            h0, c0 = cell(xproj[k * B:(k + 1) * B, :] + rec[:, 0:G], c0)

    h1_all = jnp.concatenate(h1_ts, axis=0)                      # (S*B, H), in vregs

    # ---- shared Linear + ReLU (seq branch) and folded spec branch ----
    z1 = jax.nn.relu(jnp.dot(h1_all, lin_w, preferred_element_type=f32) + lin_b)
    z2 = jax.nn.relu(jnp.dot(spec, spec_w, preferred_element_type=f32) + spec_b)
    acc = (jnp.sum(z1.reshape(S, B, H), axis=0)
           + jnp.sum(z2.reshape(Sp, B, H), axis=0))
    y = acc * (1.0 / float(S + Sp))                              # mean over time (B, H)

    # ---- LayerNorm stats + generators (per-generator affine folded) ----
    mu = jnp.mean(y, axis=-1, keepdims=True)
    var = jnp.mean((y - mu) ** 2, axis=-1, keepdims=True)
    yhat = (y - mu) * lax.rsqrt(var + 1e-5)
    yflat = jnp.dot(yhat, gen_w, preferred_element_type=f32) + gen_b   # (B, GENC)

    # ---- single lane-dense (B, 128) store: [y | y_final_flat | 0-pad] ----
    pad = jnp.zeros((B, OUT_LANES - H - GENC), f32)
    out_ref[...] = jnp.concatenate([y, yflat, pad], axis=-1)


# ---------------------------------------------------------------------------
# One-time weight preprocessing (wrapper side)
# ---------------------------------------------------------------------------
def _cat_gates(w):
    """(4, in, H) per-gate (PyTorch i,f,g,o order) -> (in, 4H), columns [i|f|o|g]."""
    w = jnp.stack([w[g] for g in GATE_ORDER], axis=0)
    return jnp.transpose(w, (1, 0, 2)).reshape(w.shape[1], 4 * w.shape[2])


def _cat_bias(b):
    return jnp.concatenate([b[g] for g in GATE_ORDER], axis=0).reshape(1, 4 * HIDDEN)


def pack_params(p):
    """Gate fusion/reorder, wavefront weight, spec_dense+Linear fold, LayerNorm
    fold, and consolidation into 2 packed VMEM weight buffers."""
    f32 = jnp.float32

    # Combined recurrent weight for the wavefront step (bf16 MXU operand).
    top = jnp.concatenate([_cat_gates(p["whh0"]), _cat_gates(p["wih1"])], axis=1)
    bot = jnp.concatenate([jnp.zeros((HIDDEN, G), f32), _cat_gates(p["whh1"])], axis=1)
    wrec = jnp.concatenate([top, bot], axis=0).astype(jnp.bfloat16)   # (2H, 2G)

    # spec_dense folded into the shared Linear (exact: no nonlinearity between).
    spec_lin_w = p["spec_w"] @ p["lin_w"]                 # (SPEC_DIM, H)
    spec_lin_b = p["spec_b"] @ p["lin_w"] + p["lin_b"]    # (1, H)

    # LayerNorm affine folded into the generator weights:
    #   out_i = yhat @ (ln_g[i][:,None]*gen_w[i]) + (ln_b[i] @ gen_w[i] + gen_b[i])
    gen_w_eff = p["ln_g"][:, :, None] * p["gen_w"]                        # (OUT_LEN, H, D)
    gen_b_eff = jnp.einsum("oh,ohd->od", p["ln_b"], p["gen_w"]) + p["gen_b"]

    wpost = jnp.zeros((WPOST_ROWS, G), f32)
    wpost = wpost.at[ROW_LINW:ROW_LINW + HIDDEN, 0:HIDDEN].set(p["lin_w"])
    wpost = wpost.at[ROW_SPECW:ROW_SPECW + SPEC_DIM, 0:HIDDEN].set(spec_lin_w)
    wpost = wpost.at[ROW_GENW:ROW_GENW + HIDDEN, 0:GENC].set(
        jnp.transpose(gen_w_eff, (1, 0, 2)).reshape(HIDDEN, GENC))
    wpost = wpost.at[ROW_WIH0:ROW_WIH0 + INPUT_DIM, 0:G].set(_cat_gates(p["wih0"]))
    wpost = wpost.at[ROW_LINB, 0:HIDDEN].set(p["lin_b"][0])
    wpost = wpost.at[ROW_SPECB, 0:HIDDEN].set(spec_lin_b[0])
    wpost = wpost.at[ROW_GENB, 0:GENC].set(gen_b_eff.reshape(GENC))
    wpost = wpost.at[ROW_B0, 0:G].set(_cat_bias(p["b0"])[0])
    wpost = wpost.at[ROW_B1, 0:G].set(_cat_bias(p["b1"])[0])

    return {"wrec": wrec, "wpost": wpost}


def lstm_classifier_forward(x, spec, packed):
    """x: (B, S, INPUT_DIM), spec: (B, SPEC_LEN, SPEC_DIM). Returns (y_final, y)."""
    B, S, Din = x.shape
    _, Sp, Dsp = spec.shape

    # Pack both activation streams into ONE kernel input (time-major, row t*B+b).
    x_flat = jnp.transpose(x, (1, 0, 2)).reshape(S * B, Din).astype(jnp.float32)
    spec_flat = jnp.transpose(spec, (1, 0, 2)).reshape(Sp * B, Dsp).astype(jnp.float32)
    act = jnp.zeros((S * B + Sp * B, ACT_COLS), jnp.float32)
    act = act.at[0:S * B, 0:Din].set(x_flat)
    act = act.at[S * B:, 0:Dsp].set(spec_flat)

    vmem = lambda: pl.BlockSpec(memory_space=pltpu.MemorySpace.VMEM)
    out = pl.pallas_call(
        lstm_classifier_kernel,
        out_shape=jax.ShapeDtypeStruct((B, OUT_LANES), jnp.float32),
        in_specs=[vmem(), vmem(), vmem()],
        out_specs=vmem(),
    )(act, packed["wrec"], packed["wpost"])

    y = out[:, 0:HIDDEN]
    y_final = out[:, HIDDEN:HIDDEN + GENC].reshape(B, OUT_LEN, OUTPUT_DIM)
    return y_final, y


# ---------------------------------------------------------------------------
# Parameter init + pure-JAX reference (matches the PyTorch forward, no dropout)
# ---------------------------------------------------------------------------
def init_params(key):
    ks = jax.random.split(key, 14)

    def rnd(k, shape, scale=0.1):
        return (scale * jax.random.normal(k, shape)).astype(jnp.float32)

    p = {}
    # LSTM weights stored per-gate (i, f, g, o) and pre-transposed for `x @ w`.
    p["wih0"] = rnd(ks[0], (4, INPUT_DIM, HIDDEN))
    p["whh0"] = rnd(ks[1], (4, HIDDEN, HIDDEN))
    p["b0"] = rnd(ks[2], (4, HIDDEN))            # b_ih + b_hh, combined
    p["wih1"] = rnd(ks[3], (4, HIDDEN, HIDDEN))
    p["whh1"] = rnd(ks[4], (4, HIDDEN, HIDDEN))
    p["b1"] = rnd(ks[5], (4, HIDDEN))
    p["spec_w"] = rnd(ks[6], (SPEC_DIM, HIDDEN))
    p["spec_b"] = rnd(ks[7], (1, HIDDEN))
    p["lin_w"] = rnd(ks[8], (HIDDEN, HIDDEN))
    p["lin_b"] = rnd(ks[9], (1, HIDDEN))
    p["ln_g"] = jnp.ones((OUT_LEN, HIDDEN), jnp.float32) + rnd(ks[10], (OUT_LEN, HIDDEN), 0.01)
    p["ln_b"] = rnd(ks[11], (OUT_LEN, HIDDEN))
    p["gen_w"] = rnd(ks[12], (OUT_LEN, HIDDEN, OUTPUT_DIM))
    p["gen_b"] = rnd(ks[13], (OUT_LEN, OUTPUT_DIM))
    return p


def reference_forward(x, spec, p):
    B = x.shape[0]

    def run_layer(inp, wih, whh, b):
        def step(carry, x_t):
            h, c = carry

            def gate(g):
                return x_t @ wih[g] + h @ whh[g] + b[g]

            i_g = jax.nn.sigmoid(gate(0))
            f_g = jax.nn.sigmoid(gate(1))
            g_g = jnp.tanh(gate(2))
            o_g = jax.nn.sigmoid(gate(3))
            c = f_g * c + i_g * g_g
            h = o_g * jnp.tanh(c)
            return (h, c), h

        z = jnp.zeros((B, HIDDEN), jnp.float32)
        _, hs = lax.scan(step, (z, z), jnp.transpose(inp, (1, 0, 2)))
        return jnp.transpose(hs, (1, 0, 2))

    h1 = run_layer(x, p["wih0"], p["whh0"], p["b0"])
    h1 = run_layer(h1, p["wih1"], p["whh1"], p["b1"])
    h2 = spec @ p["spec_w"] + p["spec_b"][0]
    cat = jnp.concatenate([h1, h2], axis=1)
    z = jax.nn.relu(cat @ p["lin_w"] + p["lin_b"][0])
    y = z.mean(axis=1)

    mu = y.mean(-1, keepdims=True)
    var = ((y - mu) ** 2).mean(-1, keepdims=True)
    yhat = (y - mu) * lax.rsqrt(var + 1e-5)
    outs = []
    for i in range(OUT_LEN):
        yn = yhat * p["ln_g"][i] + p["ln_b"][i]
        outs.append(yn @ p["gen_w"][i] + p["gen_b"][i])
    return jnp.stack(outs, axis=1), y


if __name__ == "__main__":
    key = jax.random.PRNGKey(0)
    kx, ksp, kp = jax.random.split(key, 3)
    x = jax.random.normal(kx, (BATCH, SEQ, INPUT_DIM), jnp.float32)
    spec = jax.random.normal(ksp, (BATCH, SPEC_LEN, SPEC_DIM), jnp.float32)
    params = init_params(kp)
    packed = jax.tree.map(jax.block_until_ready, pack_params(params))  # one-time prep

    fwd = jax.jit(lstm_classifier_forward)
    y_final, y = jax.block_until_ready(fwd(x, spec, packed))

    ref_yf, ref_y = reference_forward(x, spec, params)
    # y differs from the f32 reference only through the bf16 recurrence operands
    # (f32 accumulation/state), so it stays tight.
    np.testing.assert_allclose(np.asarray(y), np.asarray(ref_y), rtol=3e-3, atol=3e-3)
    # y_final additionally passes through LayerNorm, whose 1/std(y) rescaling
    # amplifies the small bf16-recurrence error -> correspondingly looser check.
    np.testing.assert_allclose(np.asarray(y_final), np.asarray(ref_yf), rtol=2e-2, atol=2e-2)

    print("KERNEL_OK")
</pallas_src>

<mosaic_0001>
module attributes {stable_mosaic.version = 11 : i64} {
  func.func @lstm_classifier_kernel(%arg0: memref<28x8xf32, #tpu.memory_space<vmem>>, %arg1: memref<64x256xbf16, #tpu.memory_space<vmem>>, %arg2: memref<85x128xf32, #tpu.memory_space<vmem>>, %arg3: memref<2x128xf32, #tpu.memory_space<vmem>>) attributes {dimension_semantics = [], scalar_prefetch = 0 : i64, scratch_operands = 0 : i64, tpu.core_type = #tpu.core_type<tc>} {
    %c0 = arith.constant 0 : index
    %c0_0 = arith.constant 0 : index
    %0 = vector.load %arg1[%c0, %c0_0] : memref<64x256xbf16, #tpu.memory_space<vmem>>, vector<64x256xbf16>
    %c72 = arith.constant 72 : index
    %c0_1 = arith.constant 0 : index
    %1 = vector.load %arg2[%c72, %c0_1] : memref<85x128xf32, #tpu.memory_space<vmem>>, vector<8x128xf32>
    %c83 = arith.constant 83 : index
    %c0_2 = arith.constant 0 : index
    %2 = vector.load %arg2[%c83, %c0_2] : memref<85x128xf32, #tpu.memory_space<vmem>>, vector<1x128xf32>
    %c84 = arith.constant 84 : index
    %c0_3 = arith.constant 0 : index
    %3 = vector.load %arg2[%c84, %c0_3] : memref<85x128xf32, #tpu.memory_space<vmem>>, vector<1x128xf32>
    %c0_4 = arith.constant 0 : index
    %c0_5 = arith.constant 0 : index
    %4 = vector.load %arg2[%c0_4, %c0_5] : memref<85x128xf32, #tpu.memory_space<vmem>>, vector<32x32xf32>
    %c80 = arith.constant 80 : index
    %c0_6 = arith.constant 0 : index
    %5 = vector.load %arg2[%c80, %c0_6] : memref<85x128xf32, #tpu.memory_space<vmem>>, vector<1x32xf32>
    %c32 = arith.constant 32 : index
    %c0_7 = arith.constant 0 : index
    %6 = vector.load %arg2[%c32, %c0_7] : memref<85x128xf32, #tpu.memory_space<vmem>>, vector<4x32xf32>
    %c81 = arith.constant 81 : index
    %c0_8 = arith.constant 0 : index
    %7 = vector.load %arg2[%c81, %c0_8] : memref<85x128xf32, #tpu.memory_space<vmem>>, vector<1x32xf32>
    %c40 = arith.constant 40 : index
    %c0_9 = arith.constant 0 : index
    %8 = vector.load %arg2[%c40, %c0_9] : memref<85x128xf32, #tpu.memory_space<vmem>>, vector<32x12xf32>
    %c82 = arith.constant 82 : index
    %c0_10 = arith.constant 0 : index
    %9 = vector.load %arg2[%c82, %c0_10] : memref<85x128xf32, #tpu.memory_space<vmem>>, vector<1x12xf32>
    %c0_11 = arith.constant 0 : index
    %c0_12 = arith.constant 0 : index
    %10 = vector.load %arg0[%c0_11, %c0_12] : memref<28x8xf32, #tpu.memory_space<vmem>>, vector<16x8xf32>
    %c16 = arith.constant 16 : index
    %c0_13 = arith.constant 0 : index
    %11 = vector.load %arg0[%c16, %c0_13] : memref<28x8xf32, #tpu.memory_space<vmem>>, vector<12x4xf32>
    %cst = arith.constant dense<0.000000e+00> : vector<16x128xf32>
    %12 = tpu.matmul %10, %1, %cst {dimension_numbers = #tpu.dot_dimension_numbers<[1], [0], [0], [1], [0, 0, 1, 1], [], []>} : vector<16x8xf32>, vector<8x128xf32>, vector<16x128xf32> -> vector<16x128xf32>
    %13 = vector.broadcast %2 : vector<1x128xf32> to vector<16x128xf32>
    %14 = arith.addf %12, %13 : vector<16x128xf32>
    %cst_14 = arith.constant 0.000000e+00 : f32
    %15 = vector.broadcast %cst_14 : f32 to vector<2x32xf32>
    %16 = vector.extract_strided_slice %14 {offsets = [0, 0], sizes = [2, 128], strides = [1, 1]} : vector<16x128xf32> to vector<2x128xf32>
    %17 = vector.extract_strided_slice %16 {offsets = [0, 0], sizes = [2, 96], strides = [1, 1]} : vector<2x128xf32> to vector<2x96xf32>
    %18 = arith.negf %17 : vector<2x96xf32>
    %19 = math.exp %18 : vector<2x96xf32>
    %cst_15 = arith.constant 1.000000e+00 : f32
    %20 = vector.broadcast %cst_15 : f32 to vector<2x96xf32>
    %21 = arith.addf %20, %19 : vector<2x96xf32>
    %22 = arith.divf %20, %21 : vector<2x96xf32>
    %23 = vector.extract_strided_slice %16 {offsets = [0, 96], sizes = [2, 32], strides = [1, 1]} : vector<2x128xf32> to vector<2x32xf32>
    %24 = math.tanh %23 : vector<2x32xf32>
    %25 = vector.extract_strided_slice %22 {offsets = [0, 32], sizes = [2, 32], strides = [1, 1]} : vector<2x96xf32> to vector<2x32xf32>
    %26 = arith.mulf %25, %15 : vector<2x32xf32>
    %27 = vector.extract_strided_slice %22 {offsets = [0, 0], sizes = [2, 32], strides = [1, 1]} : vector<2x96xf32> to vector<2x32xf32>
    %28 = arith.mulf %27, %24 : vector<2x32xf32>
    %29 = arith.addf %26, %28 : vector<2x32xf32>
    %30 = vector.extract_strided_slice %22 {offsets = [0, 64], sizes = [2, 32], strides = [1, 1]} : vector<2x96xf32> to vector<2x32xf32>
    %31 = math.tanh %29 : vector<2x32xf32>
    %32 = arith.mulf %30, %31 : vector<2x32xf32>
    %33 = tpu.concatenate %32, %15 in 1 : vector<2x32xf32>, vector<2x32xf32> -> vector<2x64xf32>
    %34 = arith.truncf %33 : vector<2x64xf32> to vector<2x64xbf16>
    %cst_16 = arith.constant dense<0.000000e+00> : vector<2x256xf32>
    %35 = tpu.matmul %34, %0, %cst_16 {dimension_numbers = #tpu.dot_dimension_numbers<[1], [0], [0], [1], [0, 0, 1, 1], [], []>} : vector<2x64xbf16>, vector<64x256xbf16>, vector<2x256xf32> -> vector<2x256xf32>
    %36 = vector.extract_strided_slice %35 {offsets = [0, 128], sizes = [2, 128], strides = [1, 1]} : vector<2x256xf32> to vector<2x128xf32>
    %37 = vector.broadcast %3 : vector<1x128xf32> to vector<2x128xf32>
    %38 = arith.addf %36, %37 : vector<2x128xf32>
    %39 = vector.extract_strided_slice %38 {offsets = [0, 0], sizes = [2, 96], strides = [1, 1]} : vector<2x128xf32> to vector<2x96xf32>
    %40 = arith.negf %39 : vector<2x96xf32>
    %41 = math.exp %40 : vector<2x96xf32>
    %cst_17 = arith.constant 1.000000e+00 : f32
    %42 = vector.broadcast %cst_17 : f32 to vector<2x96xf32>
    %43 = arith.addf %42, %41 : vector<2x96xf32>
    %44 = arith.divf %42, %43 : vector<2x96xf32>
    %45 = vector.extract_strided_slice %38 {offsets = [0, 96], sizes = [2, 32], strides = [1, 1]} : vector<2x128xf32> to vector<2x32xf32>
    %46 = math.tanh %45 : vector<2x32xf32>
    %47 = vector.extract_strided_slice %44 {offsets = [0, 32], sizes = [2, 32], strides = [1, 1]} : vector<2x96xf32> to vector<2x32xf32>
    %48 = arith.mulf %47, %15 : vector<2x32xf32>
    %49 = vector.extract_strided_slice %44 {offsets = [0, 0], sizes = [2, 32], strides = [1, 1]} : vector<2x96xf32> to vector<2x32xf32>
    %50 = arith.mulf %49, %46 : vector<2x32xf32>
    %51 = arith.addf %48, %50 : vector<2x32xf32>
    %52 = vector.extract_strided_slice %44 {offsets = [0, 64], sizes = [2, 32], strides = [1, 1]} : vector<2x96xf32> to vector<2x32xf32>
    %53 = math.tanh %51 : vector<2x32xf32>
    %54 = arith.mulf %52, %53 : vector<2x32xf32>
    %55 = vector.extract_strided_slice %14 {offsets = [2, 0], sizes = [2, 128], strides = [1, 1]} : vector<16x128xf32> to vector<2x128xf32>
    %56 = vector.extract_strided_slice %35 {offsets = [0, 0], sizes = [2, 128], strides = [1, 1]} : vector<2x256xf32> to vector<2x128xf32>
    %57 = arith.addf %55, %56 : vector<2x128xf32>
    %58 = vector.extract_strided_slice %57 {offsets = [0, 0], sizes = [2, 96], strides = [1, 1]} : vector<2x128xf32> to vector<2x96xf32>
    %59 = arith.negf %58 : vector<2x96xf32>
    %60 = math.exp %59 : vector<2x96xf32>
    %cst_18 = arith.constant 1.000000e+00 : f32
    %61 = vector.broadcast %cst_18 : f32 to vector<2x96xf32>
    %62 = arith.addf %61, %60 : vector<2x96xf32>
    %63 = arith.divf %61, %62 : vector<2x96xf32>
    %64 = vector.extract_strided_slice %57 {offsets = [0, 96], sizes = [2, 32], strides = [1, 1]} : vector<2x128xf32> to vector<2x32xf32>
    %65 = math.tanh %64 : vector<2x32xf32>
    %66 = vector.extract_strided_slice %63 {offsets = [0, 32], sizes = [2, 32], strides = [1, 1]} : vector<2x96xf32> to vector<2x32xf32>
    %67 = arith.mulf %66, %29 : vector<2x32xf32>
    %68 = vector.extract_strided_slice %63 {offsets = [0, 0], sizes = [2, 32], strides = [1, 1]} : vector<2x96xf32> to vector<2x32xf32>
    %69 = arith.mulf %68, %65 : vector<2x32xf32>
    %70 = arith.addf %67, %69 : vector<2x32xf32>
    %71 = vector.extract_strided_slice %63 {offsets = [0, 64], sizes = [2, 32], strides = [1, 1]} : vector<2x96xf32> to vector<2x32xf32>
    %72 = math.tanh %70 : vector<2x32xf32>
    %73 = arith.mulf %71, %72 : vector<2x32xf32>
    %74 = tpu.concatenate %73, %54 in 1 : vector<2x32xf32>, vector<2x32xf32> -> vector<2x64xf32>
    %75 = arith.truncf %74 : vector<2x64xf32> to vector<2x64xbf16>
    %cst_19 = arith.constant dense<0.000000e+00> : vector<2x256xf32>
    %76 = tpu.matmul %75, %0, %cst_19 {dimension_numbers = #tpu.dot_dimension_numbers<[1], [0], [0], [1], [0, 0, 1, 1], [], []>} : vector<2x64xbf16>, vector<64x256xbf16>, vector<2x256xf32> -> vector<2x256xf32>
    %77 = vector.extract_strided_slice %76 {offsets = [0, 128], sizes = [2, 128], strides = [1, 1]} : vector<2x256xf32> to vector<2x128xf32>
    %78 = vector.broadcast %3 : vector<1x128xf32> to vector<2x128xf32>
    %79 = arith.addf %77, %78 : vector<2x128xf32>
    %80 = vector.extract_strided_slice %79 {offsets = [0, 0], sizes = [2, 96], strides = [1, 1]} : vector<2x128xf32> to vector<2x96xf32>
    %81 = arith.negf %80 : vector<2x96xf32>
    %82 = math.exp %81 : vector<2x96xf32>
    %cst_20 = arith.constant 1.000000e+00 : f32
    %83 = vector.broadcast %cst_20 : f32 to vector<2x96xf32>
    %84 = arith.addf %83, %82 : vector<2x96xf32>
    %85 = arith.divf %83, %84 : vector<2x96xf32>
    %86 = vector.extract_strided_slice %79 {offsets = [0, 96], sizes = [2, 32], strides = [1, 1]} : vector<2x128xf32> to vector<2x32xf32>
    %87 = math.tanh %86 : vector<2x32xf32>
    %88 = vector.extract_strided_slice %85 {offsets = [0, 32], sizes = [2, 32], strides = [1, 1]} : vector<2x96xf32> to vector<2x32xf32>
    %89 = arith.mulf %88, %51 : vector<2x32xf32>
    %90 = vector.extract_strided_slice %85 {offsets = [0, 0], sizes = [2, 32], strides = [1, 1]} : vector<2x96xf32> to vector<2x32xf32>
    %91 = arith.mulf %90, %87 : vector<2x32xf32>
    %92 = arith.addf %89, %91 : vector<2x32xf32>
    %93 = vector.extract_strided_slice %85 {offsets = [0, 64], sizes = [2, 32], strides = [1, 1]} : vector<2x96xf32> to vector<2x32xf32>
    %94 = math.tanh %92 : vector<2x32xf32>
    %95 = arith.mulf %93, %94 : vector<2x32xf32>
    %96 = vector.extract_strided_slice %14 {offsets = [4, 0], sizes = [2, 128], strides = [1, 1]} : vector<16x128xf32> to vector<2x128xf32>
    %97 = vector.extract_strided_slice %76 {offsets = [0, 0], sizes = [2, 128], strides = [1, 1]} : vector<2x256xf32> to vector<2x128xf32>
    %98 = arith.addf %96, %97 : vector<2x128xf32>
    %99 = vector.extract_strided_slice %98 {offsets = [0, 0], sizes = [2, 96], strides = [1, 1]} : vector<2x128xf32> to vector<2x96xf32>
    %100 = arith.negf %99 : vector<2x96xf32>
    %101 = math.exp %100 : vector<2x96xf32>
    %cst_21 = arith.constant 1.000000e+00 : f32
    %102 = vector.broadcast %cst_21 : f32 to vector<2x96xf32>
    %103 = arith.addf %102, %101 : vector<2x96xf32>
    %104 = arith.divf %102, %103 : vector<2x96xf32>
    %105 = vector.extract_strided_slice %98 {offsets = [0, 96], sizes = [2, 32], strides = [1, 1]} : vector<2x128xf32> to vector<2x32xf32>
    %106 = math.tanh %105 : vector<2x32xf32>
    %107 = vector.extract_strided_slice %104 {offsets = [0, 32], sizes = [2, 32], strides = [1, 1]} : vector<2x96xf32> to vector<2x32xf32>
    %108 = arith.mulf %107, %70 : vector<2x32xf32>
    %109 = vector.extract_strided_slice %104 {offsets = [0, 0], sizes = [2, 32], strides = [1, 1]} : vector<2x96xf32> to vector<2x32xf32>
    %110 = arith.mulf %109, %106 : vector<2x32xf32>
    %111 = arith.addf %108, %110 : vector<2x32xf32>
    %112 = vector.extract_strided_slice %104 {offsets = [0, 64], sizes = [2, 32], strides = [1, 1]} : vector<2x96xf32> to vector<2x32xf32>
    %113 = math.tanh %111 : vector<2x32xf32>
    %114 = arith.mulf %112, %113 : vector<2x32xf32>
    %115 = tpu.concatenate %114, %95 in 1 : vector<2x32xf32>, vector<2x32xf32> -> vector<2x64xf32>
    %116 = arith.truncf %115 : vector<2x64xf32> to vector<2x64xbf16>
    %cst_22 = arith.constant dense<0.000000e+00> : vector<2x256xf32>
    %117 = tpu.matmul %116, %0, %cst_22 {dimension_numbers = #tpu.dot_dimension_numbers<[1], [0], [0], [1], [0, 0, 1, 1], [], []>} : vector<2x64xbf16>, vector<64x256xbf16>, vector<2x256xf32> -> vector<2x256xf32>
    %118 = vector.extract_strided_slice %117 {offsets = [0, 128], sizes = [2, 128], strides = [1, 1]} : vector<2x256xf32> to vector<2x128xf32>
    %119 = vector.broadcast %3 : vector<1x128xf32> to vector<2x128xf32>
    %120 = arith.addf %118, %119 : vector<2x128xf32>
    %121 = vector.extract_strided_slice %120 {offsets = [0, 0], sizes = [2, 96], strides = [1, 1]} : vector<2x128xf32> to vector<2x96xf32>
    %122 = arith.negf %121 : vector<2x96xf32>
    %123 = math.exp %122 : vector<2x96xf32>
    %cst_23 = arith.constant 1.000000e+00 : f32
    %124 = vector.broadcast %cst_23 : f32 to vector<2x96xf32>
    %125 = arith.addf %124, %123 : vector<2x96xf32>
    %126 = arith.divf %124, %125 : vector<2x96xf32>
    %127 = vector.extract_strided_slice %120 {offsets = [0, 96], sizes = [2, 32], strides = [1, 1]} : vector<2x128xf32> to vector<2x32xf32>
    %128 = math.tanh %127 : vector<2x32xf32>
    %129 = vector.extract_strided_slice %126 {offsets = [0, 32], sizes = [2, 32], strides = [1, 1]} : vector<2x96xf32> to vector<2x32xf32>
    %130 = arith.mulf %129, %92 : vector<2x32xf32>
    %131 = vector.extract_strided_slice %126 {offsets = [0, 0], sizes = [2, 32], strides = [1, 1]} : vector<2x96xf32> to vector<2x32xf32>
    %132 = arith.mulf %131, %128 : vector<2x32xf32>
    %133 = arith.addf %130, %132 : vector<2x32xf32>
    %134 = vector.extract_strided_slice %126 {offsets = [0, 64], sizes = [2, 32], strides = [1, 1]} : vector<2x96xf32> to vector<2x32xf32>
    %135 = math.tanh %133 : vector<2x32xf32>
    %136 = arith.mulf %134, %135 : vector<2x32xf32>
    %137 = vector.extract_strided_slice %14 {offsets = [6, 0], sizes = [2, 128], strides = [1, 1]} : vector<16x128xf32> to vector<2x128xf32>
    %138 = vector.extract_strided_slice %117 {offsets = [0, 0], sizes = [2, 128], strides = [1, 1]} : vector<2x256xf32> to vector<2x128xf32>
    %139 = arith.addf %137, %138 : vector<2x128xf32>
    %140 = vector.extract_strided_slice %139 {offsets = [0, 0], sizes = [2, 96], strides = [1, 1]} : vector<2x128xf32> to vector<2x96xf32>
    %141 = arith.negf %140 : vector<2x96xf32>
    %142 = math.exp %141 : vector<2x96xf32>
    %cst_24 = arith.constant 1.000000e+00 : f32
    %143 = vector.broadcast %cst_24 : f32 to vector<2x96xf32>
    %144 = arith.addf %143, %142 : vector<2x96xf32>
    %145 = arith.divf %143, %144 : vector<2x96xf32>
    %146 = vector.extract_strided_slice %139 {offsets = [0, 96], sizes = [2, 32], strides = [1, 1]} : vector<2x128xf32> to vector<2x32xf32>
    %147 = math.tanh %146 : vector<2x32xf32>
    %148 = vector.extract_strided_slice %145 {offsets = [0, 32], sizes = [2, 32], strides = [1, 1]} : vector<2x96xf32> to vector<2x32xf32>
    %149 = arith.mulf %148, %111 : vector<2x32xf32>
    %150 = vector.extract_strided_slice %145 {offsets = [0, 0], sizes = [2, 32], strides = [1, 1]} : vector<2x96xf32> to vector<2x32xf32>
    %151 = arith.mulf %150, %147 : vector<2x32xf32>
    %152 = arith.addf %149, %151 : vector<2x32xf32>
    %153 = vector.extract_strided_slice %145 {offsets = [0, 64], sizes = [2, 32], strides = [1, 1]} : vector<2x96xf32> to vector<2x32xf32>
    %154 = math.tanh %152 : vector<2x32xf32>
    %155 = arith.mulf %153, %154 : vector<2x32xf32>
    %156 = tpu.concatenate %155, %136 in 1 : vector<2x32xf32>, vector<2x32xf32> -> vector<2x64xf32>
    %157 = arith.truncf %156 : vector<2x64xf32> to vector<2x64xbf16>
    %cst_25 = arith.constant dense<0.000000e+00> : vector<2x256xf32>
    %158 = tpu.matmul %157, %0, %cst_25 {dimension_numbers = #tpu.dot_dimension_numbers<[1], [0], [0], [1], [0, 0, 1, 1], [], []>} : vector<2x64xbf16>, vector<64x256xbf16>, vector<2x256xf32> -> vector<2x256xf32>
    %159 = vector.extract_strided_slice %158 {offsets = [0, 128], sizes = [2, 128], strides = [1, 1]} : vector<2x256xf32> to vector<2x128xf32>
    %160 = vector.broadcast %3 : vector<1x128xf32> to vector<2x128xf32>
    %161 = arith.addf %159, %160 : vector<2x128xf32>
    %162 = vector.extract_strided_slice %161 {offsets = [0, 0], sizes = [2, 96], strides = [1, 1]} : vector<2x128xf32> to vector<2x96xf32>
    %163 = arith.negf %162 : vector<2x96xf32>
    %164 = math.exp %163 : vector<2x96xf32>
    %cst_26 = arith.constant 1.000000e+00 : f32
    %165 = vector.broadcast %cst_26 : f32 to vector<2x96xf32>
    %166 = arith.addf %165, %164 : vector<2x96xf32>
    %167 = arith.divf %165, %166 : vector<2x96xf32>
    %168 = vector.extract_strided_slice %161 {offsets = [0, 96], sizes = [2, 32], strides = [1, 1]} : vector<2x128xf32> to vector<2x32xf32>
    %169 = math.tanh %168 : vector<2x32xf32>
    %170 = vector.extract_strided_slice %167 {offsets = [0, 32], sizes = [2, 32], strides = [1, 1]} : vector<2x96xf32> to vector<2x32xf32>
    %171 = arith.mulf %170, %133 : vector<2x32xf32>
    %172 = vector.extract_strided_slice %167 {offsets = [0, 0], sizes = [2, 32], strides = [1, 1]} : vector<2x96xf32> to vector<2x32xf32>
    %173 = arith.mulf %172, %169 : vector<2x32xf32>
    %174 = arith.addf %171, %173 : vector<2x32xf32>
    %175 = vector.extract_strided_slice %167 {offsets = [0, 64], sizes = [2, 32], strides = [1, 1]} : vector<2x96xf32> to vector<2x32xf32>
    %176 = math.tanh %174 : vector<2x32xf32>
    %177 = arith.mulf %175, %176 : vector<2x32xf32>
    %178 = vector.extract_strided_slice %14 {offsets = [8, 0], sizes = [2, 128], strides = [1, 1]} : vector<16x128xf32> to vector<2x128xf32>
    %179 = vector.extract_strided_slice %158 {offsets = [0, 0], sizes = [2, 128], strides = [1, 1]} : vector<2x256xf32> to vector<2x128xf32>
    %180 = arith.addf %178, %179 : vector<2x128xf32>
    %181 = vector.extract_strided_slice %180 {offsets = [0, 0], sizes = [2, 96], strides = [1, 1]} : vector<2x128xf32> to vector<2x96xf32>
    %182 = arith.negf %181 : vector<2x96xf32>
    %183 = math.exp %182 : vector<2x96xf32>
    %cst_27 = arith.constant 1.000000e+00 : f32
    %184 = vector.broadcast %cst_27 : f32 to vector<2x96xf32>
    %185 = arith.addf %184, %183 : vector<2x96xf32>
    %186 = arith.divf %184, %185 : vector<2x96xf32>
    %187 = vector.extract_strided_slice %180 {offsets = [0, 96], sizes = [2, 32], strides = [1, 1]} : vector<2x128xf32> to vector<2x32xf32>
    %188 = math.tanh %187 : vector<2x32xf32>
    %189 = vector.extract_strided_slice %186 {offsets = [0, 32], sizes = [2, 32], strides = [1, 1]} : vector<2x96xf32> to vector<2x32xf32>
    %190 = arith.mulf %189, %152 : vector<2x32xf32>
    %191 = vector.extract_strided_slice %186 {offsets = [0, 0], sizes = [2, 32], strides = [1, 1]} : vector<2x96xf32> to vector<2x32xf32>
    %192 = arith.mulf %191, %188 : vector<2x32xf32>
    %193 = arith.addf %190, %192 : vector<2x32xf32>
    %194 = vector.extract_strided_slice %186 {offsets = [0, 64], sizes = [2, 32], strides = [1, 1]} : vector<2x96xf32> to vector<2x32xf32>
    %195 = math.tanh %193 : vector<2x32xf32>
    %196 = arith.mulf %194, %195 : vector<2x32xf32>
    %197 = tpu.concatenate %196, %177 in 1 : vector<2x32xf32>, vector<2x32xf32> -> vector<2x64xf32>
    %198 = arith.truncf %197 : vector<2x64xf32> to vector<2x64xbf16>
    %cst_28 = arith.constant dense<0.000000e+00> : vector<2x256xf32>
    %199 = tpu.matmul %198, %0, %cst_28 {dimension_numbers = #tpu.dot_dimension_numbers<[1], [0], [0], [1], [0, 0, 1, 1], [], []>} : vector<2x64xbf16>, vector<64x256xbf16>, vector<2x256xf32> -> vector<2x256xf32>
    %200 = vector.extract_strided_slice %199 {offsets = [0, 128], sizes = [2, 128], strides = [1, 1]} : vector<2x256xf32> to vector<2x128xf32>
    %201 = vector.broadcast %3 : vector<1x128xf32> to vector<2x128xf32>
    %202 = arith.addf %200, %201 : vector<2x128xf32>
    %203 = vector.extract_strided_slice %202 {offsets = [0, 0], sizes = [2, 96], strides = [1, 1]} : vector<2x128xf32> to vector<2x96xf32>
    %204 = arith.negf %203 : vector<2x96xf32>
    %205 = math.exp %204 : vector<2x96xf32>
    %cst_29 = arith.constant 1.000000e+00 : f32
    %206 = vector.broadcast %cst_29 : f32 to vector<2x96xf32>
    %207 = arith.addf %206, %205 : vector<2x96xf32>
    %208 = arith.divf %206, %207 : vector<2x96xf32>
    %209 = vector.extract_strided_slice %202 {offsets = [0, 96], sizes = [2, 32], strides = [1, 1]} : vector<2x128xf32> to vector<2x32xf32>
    %210 = math.tanh %209 : vector<2x32xf32>
    %211 = vector.extract_strided_slice %208 {offsets = [0, 32], sizes = [2, 32], strides = [1, 1]} : vector<2x96xf32> to vector<2x32xf32>
    %212 = arith.mulf %211, %174 : vector<2x32xf32>
    %213 = vector.extract_strided_slice %208 {offsets = [0, 0], sizes = [2, 32], strides = [1, 1]} : vector<2x96xf32> to vector<2x32xf32>
    %214 = arith.mulf %213, %210 : vector<2x32xf32>
    %215 = arith.addf %212, %214 : vector<2x32xf32>
    %216 = vector.extract_strided_slice %208 {offsets = [0, 64], sizes = [2, 32], strides = [1, 1]} : vector<2x96xf32> to vector<2x32xf32>
    %217 = math.tanh %215 : vector<2x32xf32>
    %218 = arith.mulf %216, %217 : vector<2x32xf32>
    %219 = vector.extract_strided_slice %14 {offsets = [10, 0], sizes = [2, 128], strides = [1, 1]} : vector<16x128xf32> to vector<2x128xf32>
    %220 = vector.extract_strided_slice %199 {offsets = [0, 0], sizes = [2, 128], strides = [1, 1]} : vector<2x256xf32> to vector<2x128xf32>
    %221 = arith.addf %219, %220 : vector<2x128xf32>
    %222 = vector.extract_strided_slice %221 {offsets = [0, 0], sizes = [2, 96], strides = [1, 1]} : vector<2x128xf32> to vector<2x96xf32>
    %223 = arith.negf %222 : vector<2x96xf32>
    %224 = math.exp %223 : vector<2x96xf32>
    %cst_30 = arith.constant 1.000000e+00 : f32
    %225 = vector.broadcast %cst_30 : f32 to vector<2x96xf32>
    %226 = arith.addf %225, %224 : vector<2x96xf32>
    %227 = arith.divf %225, %226 : vector<2x96xf32>
    %228 = vector.extract_strided_slice %221 {offsets = [0, 96], sizes = [2, 32], strides = [1, 1]} : vector<2x128xf32> to vector<2x32xf32>
    %229 = math.tanh %228 : vector<2x32xf32>
    %230 = vector.extract_strided_slice %227 {offsets = [0, 32], sizes = [2, 32], strides = [1, 1]} : vector<2x96xf32> to vector<2x32xf32>
    %231 = arith.mulf %230, %193 : vector<2x32xf32>
    %232 = vector.extract_strided_slice %227 {offsets = [0, 0], sizes = [2, 32], strides = [1, 1]} : vector<2x96xf32> to vector<2x32xf32>
    %233 = arith.mulf %232, %229 : vector<2x32xf32>
    %234 = arith.addf %231, %233 : vector<2x32xf32>
    %235 = vector.extract_strided_slice %227 {offsets = [0, 64], sizes = [2, 32], strides = [1, 1]} : vector<2x96xf32> to vector<2x32xf32>
    %236 = math.tanh %234 : vector<2x32xf32>
    %237 = arith.mulf %235, %236 : vector<2x32xf32>
    %238 = tpu.concatenate %237, %218 in 1 : vector<2x32xf32>, vector<2x32xf32> -> vector<2x64xf32>
    %239 = arith.truncf %238 : vector<2x64xf32> to vector<2x64xbf16>
    %cst_31 = arith.constant dense<0.000000e+00> : vector<2x256xf32>
    %240 = tpu.matmul %239, %0, %cst_31 {dimension_numbers = #tpu.dot_dimension_numbers<[1], [0], [0], [1], [0, 0, 1, 1], [], []>} : vector<2x64xbf16>, vector<64x256xbf16>, vector<2x256xf32> -> vector<2x256xf32>
    %241 = vector.extract_strided_slice %240 {offsets = [0, 128], sizes = [2, 128], strides = [1, 1]} : vector<2x256xf32> to vector<2x128xf32>
    %242 = vector.broadcast %3 : vector<1x128xf32> to vector<2x128xf32>
    %243 = arith.addf %241, %242 : vector<2x128xf32>
    %244 = vector.extract_strided_slice %243 {offsets = [0, 0], sizes = [2, 96], strides = [1, 1]} : vector<2x128xf32> to vector<2x96xf32>
    %245 = arith.negf %244 : vector<2x96xf32>
    %246 = math.exp %245 : vector<2x96xf32>
    %cst_32 = arith.constant 1.000000e+00 : f32
    %247 = vector.broadcast %cst_32 : f32 to vector<2x96xf32>
    %248 = arith.addf %247, %246 : vector<2x96xf32>
    %249 = arith.divf %247, %248 : vector<2x96xf32>
    %250 = vector.extract_strided_slice %243 {offsets = [0, 96], sizes = [2, 32], strides = [1, 1]} : vector<2x128xf32> to vector<2x32xf32>
    %251 = math.tanh %250 : vector<2x32xf32>
    %252 = vector.extract_strided_slice %249 {offsets = [0, 32], sizes = [2, 32], strides = [1, 1]} : vector<2x96xf32> to vector<2x32xf32>
    %253 = arith.mulf %252, %215 : vector<2x32xf32>
    %254 = vector.extract_strided_slice %249 {offsets = [0, 0], sizes = [2, 32], strides = [1, 1]} : vector<2x96xf32> to vector<2x32xf32>
    %255 = arith.mulf %254, %251 : vector<2x32xf32>
    %256 = arith.addf %253, %255 : vector<2x32xf32>
    %257 = vector.extract_strided_slice %249 {offsets = [0, 64], sizes = [2, 32], strides = [1, 1]} : vector<2x96xf32> to vector<2x32xf32>
    %258 = math.tanh %256 : vector<2x32xf32>
    %259 = arith.mulf %257, %258 : vector<2x32xf32>
    %260 = vector.extract_strided_slice %14 {offsets = [12, 0], sizes = [2, 128], strides = [1, 1]} : vector<16x128xf32> to vector<2x128xf32>
    %261 = vector.extract_strided_slice %240 {offsets = [0, 0], sizes = [2, 128], strides = [1, 1]} : vector<2x256xf32> to vector<2x128xf32>
    %262 = arith.addf %260, %261 : vector<2x128xf32>
    %263 = vector.extract_strided_slice %262 {offsets = [0, 0], sizes = [2, 96], strides = [1, 1]} : vector<2x128xf32> to vector<2x96xf32>
    %264 = arith.negf %263 : vector<2x96xf32>
    %265 = math.exp %264 : vector<2x96xf32>
    %cst_33 = arith.constant 1.000000e+00 : f32
    %266 = vector.broadcast %cst_33 : f32 to vector<2x96xf32>
    %267 = arith.addf %266, %265 : vector<2x96xf32>
    %268 = arith.divf %266, %267 : vector<2x96xf32>
    %269 = vector.extract_strided_slice %262 {offsets = [0, 96], sizes = [2, 32], strides = [1, 1]} : vector<2x128xf32> to vector<2x32xf32>
    %270 = math.tanh %269 : vector<2x32xf32>
    %271 = vector.extract_strided_slice %268 {offsets = [0, 32], sizes = [2, 32], strides = [1, 1]} : vector<2x96xf32> to vector<2x32xf32>
    %272 = arith.mulf %271, %234 : vector<2x32xf32>
    %273 = vector.extract_strided_slice %268 {offsets = [0, 0], sizes = [2, 32], strides = [1, 1]} : vector<2x96xf32> to vector<2x32xf32>
    %274 = arith.mulf %273, %270 : vector<2x32xf32>
    %275 = arith.addf %272, %274 : vector<2x32xf32>
    %276 = vector.extract_strided_slice %268 {offsets = [0, 64], sizes = [2, 32], strides = [1, 1]} : vector<2x96xf32> to vector<2x32xf32>
    %277 = math.tanh %275 : vector<2x32xf32>
    %278 = arith.mulf %276, %277 : vector<2x32xf32>
    %279 = tpu.concatenate %278, %259 in 1 : vector<2x32xf32>, vector<2x32xf32> -> vector<2x64xf32>
    %280 = arith.truncf %279 : vector<2x64xf32> to vector<2x64xbf16>
    %cst_34 = arith.constant dense<0.000000e+00> : vector<2x256xf32>
    %281 = tpu.matmul %280, %0, %cst_34 {dimension_numbers = #tpu.dot_dimension_numbers<[1], [0], [0], [1], [0, 0, 1, 1], [], []>} : vector<2x64xbf16>, vector<64x256xbf16>, vector<2x256xf32> -> vector<2x256xf32>
    %282 = vector.extract_strided_slice %281 {offsets = [0, 128], sizes = [2, 128], strides = [1, 1]} : vector<2x256xf32> to vector<2x128xf32>
    %283 = vector.broadcast %3 : vector<1x128xf32> to vector<2x128xf32>
    %284 = arith.addf %282, %283 : vector<2x128xf32>
    %285 = vector.extract_strided_slice %284 {offsets = [0, 0], sizes = [2, 96], strides = [1, 1]} : vector<2x128xf32> to vector<2x96xf32>
    %286 = arith.negf %285 : vector<2x96xf32>
    %287 = math.exp %286 : vector<2x96xf32>
    %cst_35 = arith.constant 1.000000e+00 : f32
    %288 = vector.broadcast %cst_35 : f32 to vector<2x96xf32>
    %289 = arith.addf %288, %287 : vector<2x96xf32>
    %290 = arith.divf %288, %289 : vector<2x96xf32>
    %291 = vector.extract_strided_slice %284 {offsets = [0, 96], sizes = [2, 32], strides = [1, 1]} : vector<2x128xf32> to vector<2x32xf32>
    %292 = math.tanh %291 : vector<2x32xf32>
    %293 = vector.extract_strided_slice %290 {offsets = [0, 32], sizes = [2, 32], strides = [1, 1]} : vector<2x96xf32> to vector<2x32xf32>
    %294 = arith.mulf %293, %256 : vector<2x32xf32>
    %295 = vector.extract_strided_slice %290 {offsets = [0, 0], sizes = [2, 32], strides = [1, 1]} : vector<2x96xf32> to vector<2x32xf32>
    %296 = arith.mulf %295, %292 : vector<2x32xf32>
    %297 = arith.addf %294, %296 : vector<2x32xf32>
    %298 = vector.extract_strided_slice %290 {offsets = [0, 64], sizes = [2, 32], strides = [1, 1]} : vector<2x96xf32> to vector<2x32xf32>
    %299 = math.tanh %297 : vector<2x32xf32>
    %300 = arith.mulf %298, %299 : vector<2x32xf32>
    %301 = vector.extract_strided_slice %14 {offsets = [14, 0], sizes = [2, 128], strides = [1, 1]} : vector<16x128xf32> to vector<2x128xf32>
    %302 = vector.extract_strided_slice %281 {offsets = [0, 0], sizes = [2, 128], strides = [1, 1]} : vector<2x256xf32> to vector<2x128xf32>
    %303 = arith.addf %301, %302 : vector<2x128xf32>
    %304 = vector.extract_strided_slice %303 {offsets = [0, 0], sizes = [2, 96], strides = [1, 1]} : vector<2x128xf32> to vector<2x96xf32>
    %305 = arith.negf %304 : vector<2x96xf32>
    %306 = math.exp %305 : vector<2x96xf32>
    %cst_36 = arith.constant 1.000000e+00 : f32
    %307 = vector.broadcast %cst_36 : f32 to vector<2x96xf32>
    %308 = arith.addf %307, %306 : vector<2x96xf32>
    %309 = arith.divf %307, %308 : vector<2x96xf32>
    %310 = vector.extract_strided_slice %303 {offsets = [0, 96], sizes = [2, 32], strides = [1, 1]} : vector<2x128xf32> to vector<2x32xf32>
    %311 = math.tanh %310 : vector<2x32xf32>
    %312 = vector.extract_strided_slice %309 {offsets = [0, 32], sizes = [2, 32], strides = [1, 1]} : vector<2x96xf32> to vector<2x32xf32>
    %313 = arith.mulf %312, %275 : vector<2x32xf32>
    %314 = vector.extract_strided_slice %309 {offsets = [0, 0], sizes = [2, 32], strides = [1, 1]} : vector<2x96xf32> to vector<2x32xf32>
    %315 = arith.mulf %314, %311 : vector<2x32xf32>
    %316 = arith.addf %313, %315 : vector<2x32xf32>
    %317 = vector.extract_strided_slice %309 {offsets = [0, 64], sizes = [2, 32], strides = [1, 1]} : vector<2x96xf32> to vector<2x32xf32>
    %318 = math.tanh %316 : vector<2x32xf32>
    %319 = arith.mulf %317, %318 : vector<2x32xf32>
    %320 = tpu.concatenate %319, %300 in 1 : vector<2x32xf32>, vector<2x32xf32> -> vector<2x64xf32>
    %321 = arith.truncf %320 : vector<2x64xf32> to vector<2x64xbf16>
    %cst_37 = arith.constant dense<0.000000e+00> : vector<2x256xf32>
    %322 = tpu.matmul %321, %0, %cst_37 {dimension_numbers = #tpu.dot_dimension_numbers<[1], [0], [0], [1], [0, 0, 1, 1], [], []>} : vector<2x64xbf16>, vector<64x256xbf16>, vector<2x256xf32> -> vector<2x256xf32>
    %323 = vector.extract_strided_slice %322 {offsets = [0, 128], sizes = [2, 128], strides = [1, 1]} : vector<2x256xf32> to vector<2x128xf32>
    %324 = vector.broadcast %3 : vector<1x128xf32> to vector<2x128xf32>
    %325 = arith.addf %323, %324 : vector<2x128xf32>
    %326 = vector.extract_strided_slice %325 {offsets = [0, 0], sizes = [2, 96], strides = [1, 1]} : vector<2x128xf32> to vector<2x96xf32>
    %327 = arith.negf %326 : vector<2x96xf32>
    %328 = math.exp %327 : vector<2x96xf32>
    %cst_38 = arith.constant 1.000000e+00 : f32
    %329 = vector.broadcast %cst_38 : f32 to vector<2x96xf32>
    %330 = arith.addf %329, %328 : vector<2x96xf32>
    %331 = arith.divf %329, %330 : vector<2x96xf32>
    %332 = vector.extract_strided_slice %325 {offsets = [0, 96], sizes = [2, 32], strides = [1, 1]} : vector<2x128xf32> to vector<2x32xf32>
    %333 = math.tanh %332 : vector<2x32xf32>
    %334 = vector.extract_strided_slice %331 {offsets = [0, 32], sizes = [2, 32], strides = [1, 1]} : vector<2x96xf32> to vector<2x32xf32>
    %335 = arith.mulf %334, %297 : vector<2x32xf32>
    %336 = vector.extract_strided_slice %331 {offsets = [0, 0], sizes = [2, 32], strides = [1, 1]} : vector<2x96xf32> to vector<2x32xf32>
    %337 = arith.mulf %336, %333 : vector<2x32xf32>
    %338 = arith.addf %335, %337 : vector<2x32xf32>
    %339 = vector.extract_strided_slice %331 {offsets = [0, 64], sizes = [2, 32], strides = [1, 1]} : vector<2x96xf32> to vector<2x32xf32>
    %340 = math.tanh %338 : vector<2x32xf32>
    %341 = arith.mulf %339, %340 : vector<2x32xf32>
    %342 = tpu.concatenate %54, %95, %136, %177, %218, %259, %300, %341 in 0 : vector<2x32xf32>, vector<2x32xf32>, vector<2x32xf32>, vector<2x32xf32>, vector<2x32xf32>, vector<2x32xf32>, vector<2x32xf32>, vector<2x32xf32> -> vector<16x32xf32>
    %cst_39 = arith.constant dense<0.000000e+00> : vector<16x32xf32>
    %343 = tpu.matmul %342, %4, %cst_39 {dimension_numbers = #tpu.dot_dimension_numbers<[1], [0], [0], [1], [0, 0, 1, 1], [], []>} : vector<16x32xf32>, vector<32x32xf32>, vector<16x32xf32> -> vector<16x32xf32>
    %344 = vector.broadcast %5 : vector<1x32xf32> to vector<16x32xf32>
    %345 = arith.addf %343, %344 : vector<16x32xf32>
    %cst_40 = arith.constant 0.000000e+00 : f32
    %346 = vector.broadcast %cst_40 : f32 to vector<16x32xf32>
    %347 = arith.maximumf %345, %346 : vector<16x32xf32>
    %cst_41 = arith.constant dense<0.000000e+00> : vector<12x32xf32>
    %348 = tpu.matmul %11, %6, %cst_41 {dimension_numbers = #tpu.dot_dimension_numbers<[1], [0], [0], [1], [0, 0, 1, 1], [], []>} : vector<12x4xf32>, vector<4x32xf32>, vector<12x32xf32> -> vector<12x32xf32>
    %349 = vector.broadcast %7 : vector<1x32xf32> to vector<12x32xf32>
    %350 = arith.addf %348, %349 : vector<12x32xf32>
    %cst_42 = arith.constant 0.000000e+00 : f32
    %351 = vector.broadcast %cst_42 : f32 to vector<12x32xf32>
    %352 = arith.maximumf %350, %351 : vector<12x32xf32>
    %353 = vector.shape_cast %347 : vector<16x32xf32> to vector<8x2x32xf32>
    %cst_43 = arith.constant dense<0.000000e+00> : vector<2x32xf32>
    %354 = vector.multi_reduction <add>, %353, %cst_43 [0] : vector<8x2x32xf32> to vector<2x32xf32>
    %355 = vector.shape_cast %352 : vector<12x32xf32> to vector<6x2x32xf32>
    %cst_44 = arith.constant dense<0.000000e+00> : vector<2x32xf32>
    %356 = vector.multi_reduction <add>, %355, %cst_44 [0] : vector<6x2x32xf32> to vector<2x32xf32>
    %357 = arith.addf %354, %356 : vector<2x32xf32>
    %cst_45 = arith.constant 0.0714285746 : f32
    %358 = vector.broadcast %cst_45 : f32 to vector<2x32xf32>
    %359 = arith.mulf %357, %358 : vector<2x32xf32>
    %cst_46 = arith.constant dense<0.000000e+00> : vector<2xf32>
    %360 = vector.multi_reduction <add>, %359, %cst_46 [1] : vector<2x32xf32> to vector<2xf32>
    %361 = vector.shape_cast %360 : vector<2xf32> to vector<2x1xf32>
    %cst_47 = arith.constant 3.200000e+01 : f32
    %362 = vector.broadcast %cst_47 : f32 to vector<2x1xf32>
    %363 = arith.divf %361, %362 : vector<2x1xf32>
    %364 = vector.broadcast %363 : vector<2x1xf32> to vector<2x32xf32>
    %365 = arith.subf %359, %364 : vector<2x32xf32>
    %366 = arith.mulf %365, %365 : vector<2x32xf32>
    %cst_48 = arith.constant dense<0.000000e+00> : vector<2xf32>
    %367 = vector.multi_reduction <add>, %366, %cst_48 [1] : vector<2x32xf32> to vector<2xf32>
    %368 = vector.shape_cast %367 : vector<2xf32> to vector<2x1xf32>
    %cst_49 = arith.constant 3.200000e+01 : f32
    %369 = vector.broadcast %cst_49 : f32 to vector<2x1xf32>
    %370 = arith.divf %368, %369 : vector<2x1xf32>
    %371 = vector.broadcast %363 : vector<2x1xf32> to vector<2x32xf32>
    %372 = arith.subf %359, %371 : vector<2x32xf32>
    %cst_50 = arith.constant 9.99999974E-6 : f32
    %373 = vector.broadcast %cst_50 : f32 to vector<2x1xf32>
    %374 = arith.addf %370, %373 : vector<2x1xf32>
    %375 = math.rsqrt %374 : vector<2x1xf32>
    %376 = vector.broadcast %375 : vector<2x1xf32> to vector<2x32xf32>
    %377 = arith.mulf %372, %376 : vector<2x32xf32>
    %cst_51 = arith.constant dense<0.000000e+00> : vector<2x12xf32>
    %378 = tpu.matmul %377, %8, %cst_51 {dimension_numbers = #tpu.dot_dimension_numbers<[1], [0], [0], [1], [0, 0, 1, 1], [], []>} : vector<2x32xf32>, vector<32x12xf32>, vector<2x12xf32> -> vector<2x12xf32>
    %379 = vector.broadcast %9 : vector<1x12xf32> to vector<2x12xf32>
    %380 = arith.addf %378, %379 : vector<2x12xf32>
    %cst_52 = arith.constant 0.000000e+00 : f32
    %381 = vector.broadcast %cst_52 : f32 to vector<2x84xf32>
    %382 = tpu.concatenate %359, %380, %381 in 1 : vector<2x32xf32>, vector<2x12xf32>, vector<2x84xf32> -> vector<2x128xf32>
    %c0_53 = arith.constant 0 : index
    %c0_54 = arith.constant 0 : index
    %383 = vector.load %arg3[%c0_53, %c0_54] : memref<2x128xf32, #tpu.memory_space<vmem>>, vector<2x128xf32>
    tpu.vector_store %arg3[%c0_53, %c0_54], %382 {strides = array<i32>} : memref<2x128xf32, #tpu.memory_space<vmem>>, vector<2x128xf32>,
    return
  }
}

</mosaic_0001>

<llo_original>
// kernel: lstm_classifier_forward.1
$region0: #{lstm_classifier_forward.1}
  #allocation0 [shape = 'u32[]', space=smem, size = 0x4, offset = 0x4, fixed_abs, tag = 'smem constant byte address 0x4 - core index']
  #allocation1 [shape = 'u32[144,128]{1,0:T(1,128)}', space=vmem, size = 0x12000, scoped, tag = 'internal scratch']
  %s0 = inlined_call_operand.vmem [shape: f32[28,8], index: 0, kind: input, shape index: {}]
  %s1 = inlined_call_operand.vmem [shape: bf16[64,256], index: 1, kind: input, shape index: {}]
  %s2 = inlined_call_operand.vmem [shape: f32[85,128], index: 2, kind: input, shape index: {}]
  %s3 = inlined_call_operand.vmem [shape: f32[2,128], index: 3, kind: output, shape index: {}]
  %s4 = sld [smem:[#allocation0]]
  $region22: #{lstm_classifier_forward.1} parent=0
    _
  %s6 = ssub.s32 1, %s4
  %s7 = scalar_select 0, %s6, %s4
  // Predicated region
  $region2: #{lstm_classifier_forward.1} parent=0 // pred_check
    _
  $region3: #{lstm_classifier_forward.1} parent=0 // pred_check_branch
    %9 = sbr.rel (0) target = $region5
  $region4: #{lstm_classifier_forward.1} parent=0 // pred_region
    _
  $region5: #{lstm_classifier_forward.1} parent=0 // pred_fallthru
    _
  // Predicated region
  $region6: #{lstm_classifier_forward.1} parent=0 // pred_check
    _
  $region7: #{lstm_classifier_forward.1} parent=0 // pred_check_branch
    %11 = sbr.rel (0) target = $region9
  $region8: #{lstm_classifier_forward.1} parent=0 // pred_region
    _
  $region9: #{lstm_classifier_forward.1} parent=0 // pred_fallthru
    _
  // Predicated region
  $region10: #{lstm_classifier_forward.1} parent=0 // pred_check
    _
  $region11: #{lstm_classifier_forward.1} parent=0 // pred_check_branch
    %13 = sbr.rel (0) target = $region13
  $region12: #{lstm_classifier_forward.1} parent=0 // pred_region
    _
  $region13: #{lstm_classifier_forward.1} parent=0 // pred_fallthru
    _
  %v15 = vld [vmem:[%s1] sm:$0xff]
  %v16 = vld [vmem:[%s1 + $0x8] sm:$0xff]
  %v17 = vld [vmem:[%s1 + $0x10] sm:$0xff]
  %v18 = vld [vmem:[%s1 + $0x18] sm:$0xff]
  %v19 = vld [vmem:[%s1 + $0x20] sm:$0xff]
  %v20 = vld [vmem:[%s1 + $0x28] sm:$0xff]
  %v21 = vld [vmem:[%s1 + $0x30] sm:$0xff]
  %v22 = vld [vmem:[%s1 + $0x38] sm:$0xff]
  %v23 = vld [vmem:[%s2 + $0x48] sm:$0xff]
  %v24 = vld [vmem:[%s2 + $0x53] sm:$0x1]
  %v25 = vld [vmem:[%s2 + $0x54] sm:$0x1]
  %v26 = vld [vmem:[%s2] sm:$0xff]
  %v27 = vld [vmem:[%s2 + $0x8] sm:$0xff]
  %v28 = vld [vmem:[%s2 + $0x10] sm:$0xff]
  %v29 = vld [vmem:[%s2 + $0x18] sm:$0xff]
  %v30 = vld [vmem:[%s2 + $0x50] sm:$0x1]
  %v31 = vld [vmem:[%s2 + $0x20] sm:$0xf]
  %v32 = vld [vmem:[%s2 + $0x51] sm:$0x1]
  %v33 = vld [vmem:[%s2 + $0x28] sm:$0xff]
  %v34 = vld [vmem:[%s2 + $0x30] sm:$0xff]
  %v35 = vld [vmem:[%s2 + $0x38] sm:$0xff]
  %v36 = vld [vmem:[%s2 + $0x40] sm:$0xff]
  %v37 = vld [vmem:[%s2 + $0x52] sm:$0x1]
  %v38 = vld [vmem:[%s0] sm:$0xff]
  %v39 = vld [vmem:[%s0 + $0x8] sm:$0xff]
  %v40 = vld [vmem:[%s0 + $0x10] sm:$0xff]
  %v41 = vld [vmem:[%s0 + $0x18] sm:$0xf]
  %v42 = vlaneseq
  %v43 = vshrl.u32 %v42, 7
  %v44 = vsub.s32 0, %v43
  %v45 = vrot.slane %v24, %v44
  %vm46 = vcmask 64512
  %v48 = vsel %vm46, %v38, 0
  %v51 = vsel %vm46, %v39, 0
  %53 = vmatprep.subr.mxu0 0.0
  %54 = vmatpush1.msra.mxu0 0.0
  %55 = vmatprep.subr.mxu0 0.0
  %56 = vmatpush1.msra.mxu0 0.0
  %57 = vmatprep.subr.mxu0 0.0
  %58 = vmatpush1.msra.mxu0 0.0
  %59 = vmatprep.subr.mxu0 0.0
  %60 = vmatpush1.msra.mxu0 0.0
  %61 = vmatprep.subr.mxu0 0.0
  %62 = vmatpush1.msra.mxu0 0.0
  %63 = vmatprep.subr.mxu0 0.0
  %64 = vmatpush1.msra.mxu0 0.0
  %65 = vmatprep.subr.mxu0 0.0
  %66 = vmatpush1.msra.mxu0 0.0
  %67 = vmatprep.subr.mxu0 0.0
  %68 = vmatpush1.msra.mxu0 0.0
  %69 = vmatprep.subr.mxu0 0.0
  %70 = vmatpush1.msra.mxu0 0.0
  %71 = vmatprep.subr.mxu0 0.0
  %72 = vmatpush1.msra.mxu0 0.0
  %73 = vmatprep.subr.mxu0 0.0
  %74 = vmatpush1.msra.mxu0 0.0
  %75 = vmatprep.subr.mxu0 0.0
  %76 = vmatpush1.msra.mxu0 0.0
  %77 = vmatprep.subr.mxu0 0.0
  %78 = vmatpush1.msra.mxu0 0.0
  %79 = vmatprep.subr.mxu0 0.0
  %80 = vmatpush1.msra.mxu0 0.0
  %81 = vmatprep.subr.mxu0 0.0
  %82 = vmatpush1.msra.mxu0 0.0
  %83 = vmatprep.subr.mxu0 0.0
  %84 = vmatpush1.msra.mxu0 %v23
  %85 = vmatprep.subr.mxu0 0.0
  %86 = vmatpush2.msra.mxu0 0.0
  %87 = vmatprep.subr.mxu0 0.0
  %88 = vmatpush2.msra.mxu0 0.0
  %89 = vmatprep.subr.mxu0 0.0
  %90 = vmatpush2.msra.mxu0 0.0
  %91 = vmatprep.subr.mxu0 0.0
  %92 = vmatpush2.msra.mxu0 0.0
  %93 = vmatprep.subr.mxu0 0.0
  %94 = vmatpush2.msra.mxu0 0.0
  %95 = vmatprep.subr.mxu0 0.0
  %96 = vmatpush2.msra.mxu0 0.0
  %97 = vmatprep.subr.mxu0 0.0
  %98 = vmatpush2.msra.mxu0 0.0
  %99 = vmatprep.subr.mxu0 0.0
  %100 = vmatpush2.msra.mxu0 0.0
  %101 = vmatprep.subr.mxu0 0.0
  %102 = vmatpush2.msra.mxu0 0.0
  %103 = vmatprep.subr.mxu0 0.0
  %104 = vmatpush2.msra.mxu0 0.0
  %105 = vmatprep.subr.mxu0 0.0
  %106 = vmatpush2.msra.mxu0 0.0
  %107 = vmatprep.subr.mxu0 0.0
  %108 = vmatpush2.msra.mxu0 0.0
  %109 = vmatprep.subr.mxu0 0.0
  %110 = vmatpush2.msra.mxu0 0.0
  %111 = vmatprep.subr.mxu0 0.0
  %112 = vmatpush2.msra.mxu0 0.0
  %113 = vmatprep.subr.mxu0 0.0
  %114 = vmatpush2.msra.mxu0 0.0
  %115 = vmatprep.subr.mxu0 0.0
  %116 = vmatpush2.msra.mxu0 0.0
  %117 = vmatprep.mubr.f32.mxu0 0.0
  %118 = vmatmul.mubr.f32.gmra.mxu0 %v48
  %v119 = vpop.f32.mrf.mxu0
  %v120 = vadd.f32 %v45, %v119
  %v121 = vpop.f32.mrf.mxu0
  %122 = vmatprep.mubr.f32.mxu0 0.0
  %123 = vmatmul.mubr.f32.gmra.mxu0 %v51
  %v124 = vpop.f32.mrf.mxu0
  %v125 = vadd.f32 %v45, %v124
  %v126 = vpop.f32.mrf.mxu0
  %127 = vdwg.mxu0
  %v128 = vxor.u32 %v120, 2147483648
  %v129 = vmul.f32 %v128, 1.442695
  %v130 = vpow.pop %v129
  %v131 = vadd.f32 %v130, 1.0
  %v132 = vrcp.pop %v131
  %v133 = vmul.f32 1.0, %v132
  %v134 = vtanh.pop %v120
  %v135 = vmul.f32 %v133, 0.0
  %137 = vrot.lane.b32.xlu0 %v134, 32
  %v138 = vpop.permute.xlu0 %137
  %v140 = vmul.f32 %v133, %v138
  %142 = vrot.lane.b32.xlu0 %v140, 32
  %v143 = vpop.permute.xlu0 %142
  %v145 = vadd.f32 %v135, %v143
  %v146 = vtanh.pop %v145
  %148 = vrot.lane.b32.xlu0 %v146, 32
  %v149 = vpop.permute.xlu0 %148
  %v151 = vmul.f32 %v133, %v149
  %153 = vrot.lane.b32.xlu0 %v151, 64
  %v154 = vpop.permute.xlu0 %153
  %vm156 = vcmask 261120
  %v157 = vsel %vm156, %v154, 0.0
  %v158 = vpack.c.bf16 %v157, %v157
  %v167 = vunpack.c.l.b16 %v15
  %v168 = vunpack.c.h.b16 %v15
  %v169 = vunpack.c.l.b16 %v16
  %v170 = vunpack.c.h.b16 %v16
  %v171 = vunpack.c.l.b16 %v17
  %v172 = vunpack.c.h.b16 %v17
  %v173 = vunpack.c.l.b16 %v18
  %v174 = vunpack.c.h.b16 %v18
  %v175 = vunpack.c.l.b16 %v19
  %v176 = vunpack.c.h.b16 %v19
  %v177 = vunpack.c.l.b16 %v20
  %v178 = vunpack.c.h.b16 %v20
  %v179 = vunpack.c.l.b16 %v21
  %v180 = vunpack.c.h.b16 %v21
  %v181 = vunpack.c.l.b16 %v22
  %v182 = vunpack.c.h.b16 %v22
  %v183 = vpack.c.b16 %v169, %v167
  %v184 = vpack.c.b16 %v170, %v168
  %v185 = vpack.c.b16 %v173, %v171
  %v186 = vpack.c.b16 %v174, %v172
  %v187 = vpack.c.b16 %v177, %v175
  %v188 = vpack.c.b16 %v178, %v176
  %v189 = vpack.c.b16 %v181, %v179
  %v190 = vpack.c.b16 %v182, %v180
  %vm199 = vcmask 523264
  %v201 = vsel %vm199, %v158, 0
  %203 = vmatprep.subr.bf16.mxu0 0
  %204 = vmatpush1.bf16.msra.mxu0 0
  %205 = vmatprep.subr.bf16.mxu0 0
  %206 = vmatpush1.bf16.msra.mxu0 0
  %207 = vmatprep.subr.bf16.mxu0 0
  %208 = vmatpush1.bf16.msra.mxu0 0
  %209 = vmatprep.subr.bf16.mxu0 0
  %210 = vmatpush1.bf16.msra.mxu0 0
  %211 = vmatprep.subr.bf16.mxu0 %v190
  %212 = vmatpush1.bf16.msra.mxu0 %v189
  %213 = vmatprep.subr.bf16.mxu0 %v188
  %214 = vmatpush1.bf16.msra.mxu0 %v187
  %215 = vmatprep.subr.bf16.mxu0 %v186
  %216 = vmatpush1.bf16.msra.mxu0 %v185
  %217 = vmatprep.subr.bf16.mxu0 %v184
  %218 = vmatpush1.bf16.msra.mxu0 %v183
  %219 = vmatprep.subr.bf16.mxu0 0
  %220 = vmatpush2.bf16.msra.mxu0 0
  %221 = vmatprep.subr.bf16.mxu0 0
  %222 = vmatpush2.bf16.msra.mxu0 0
  %223 = vmatprep.subr.bf16.mxu0 0
  %224 = vmatpush2.bf16.msra.mxu0 0
  %225 = vmatprep.subr.bf16.mxu0 0
  %226 = vmatpush2.bf16.msra.mxu0 0
  %227 = vmatprep.subr.bf16.mxu0 0
  %228 = vmatpush2.bf16.msra.mxu0 0
  %229 = vmatprep.subr.bf16.mxu0 0
  %230 = vmatpush2.bf16.msra.mxu0 0
  %231 = vmatprep.subr.bf16.mxu0 0
  %232 = vmatpush2.bf16.msra.mxu0 0
  %233 = vmatprep.subr.bf16.mxu0 0
  %234 = vmatpush2.bf16.msra.mxu0 0
  %235 = vmatprep.mubr.bf16.mxu0 0
  %236 = vmatmul.mubr.bf16.gmra.mxu0 %v201
  %v237 = vpop.f32.mrf.mxu0
  %v238 = vadd.f32 0.0, %v237
  %v239 = vpop.f32.mrf.mxu0
  %v240 = vadd.f32 0.0, %v239
  %v241 = vpop.f32.mrf.mxu0
  %v242 = vpop.f32.mrf.mxu0
  %243 = vdwg.mxu0
  %v244 = vlaneseq
  %v245 = vshrl.u32 %v244, 7
  %v246 = vsub.s32 0, %v245
  %v247 = vrot.slane %v25, %v246
  %v248 = vadd.f32 %v240, %v247
  %v249 = vxor.u32 %v248, 2147483648
  %v250 = vmul.f32 %v249, 1.442695
  %v251 = vpow.pop %v250
  %v252 = vadd.f32 %v251, 1.0
  %v253 = vrcp.pop %v252
  %v254 = vmul.f32 1.0, %v253
  %v255 = vtanh.pop %v248
  %v256 = vmul.f32 %v254, 0.0
  %258 = vrot.lane.b32.xlu0 %v255, 32
  %v259 = vpop.permute.xlu0 %258
  %v261 = vmul.f32 %v254, %v259
  %263 = vrot.lane.b32.xlu0 %v261, 32
  %v264 = vpop.permute.xlu0 %263
  %v266 = vadd.f32 %v256, %v264
  %v267 = vtanh.pop %v266
  %269 = vrot.lane.b32.xlu0 %v267, 32
  %v270 = vpop.permute.xlu0 %269
  %v272 = vmul.f32 %v254, %v270
  %v274 = vrot.slane %v238, 6
  %v276 = vadd.f32 %v120, %v274
  %v277 = vxor.u32 %v276, 2147483648
  %v278 = vmul.f32 %v277, 1.442695
  %v279 = vpow.pop %v278
  %v280 = vadd.f32 %v279, 1.0
  %v281 = vrcp.pop %v280
  %v282 = vmul.f32 1.0, %v281
  %v283 = vtanh.pop %v276
  %v285 = vrot.slane %v145, 6
  %v287 = vmul.f32 %v282, %v285
  %289 = vrot.lane.b32.xlu0 %v283, 32
  %v290 = vpop.permute.xlu0 %289
  %v292 = vmul.f32 %v282, %v290
  %294 = vrot.lane.b32.xlu0 %v292, 32
  %v295 = vpop.permute.xlu0 %294
  %v297 = vadd.f32 %v287, %v295
  %v298 = vtanh.pop %v297
  %300 = vrot.lane.b32.xlu0 %v298, 32
  %v301 = vpop.permute.xlu0 %300
  %v303 = vmul.f32 %v282, %v301
  %305 = vrot.lane.b32.xlu0 %v303, 64
  %v306 = vpop.permute.xlu0 %305
  %v309 = vrot.slane %v272, 6
  %310 = vrot.lane.b32.xlu0 %v309, 96
  %v311 = vpop.permute.xlu0 %310
  %v313 = vsel %vm156, %v306, %v311
  %v314 = vpack.c.bf16 %v313, %v313
  %v316 = vrot.slane %v314, 1
  %v318 = vsel %vm199, %v316, 0
  %320 = vmatprep.subr.bf16.mxu0 0
  %321 = vmatpush1.bf16.msra.mxu0 0
  %322 = vmatprep.subr.bf16.mxu0 0
  %323 = vmatpush1.bf16.msra.mxu0 0
  %324 = vmatprep.subr.bf16.mxu0 0
  %325 = vmatpush1.bf16.msra.mxu0 0
  %326 = vmatprep.subr.bf16.mxu0 0
  %327 = vmatpush1.bf16.msra.mxu0 0
  %328 = vmatprep.subr.bf16.mxu0 %v190
  %329 = vmatpush1.bf16.msra.mxu0 %v189
  %330 = vmatprep.subr.bf16.mxu0 %v188
  %331 = vmatpush1.bf16.msra.mxu0 %v187
  %332 = vmatprep.subr.bf16.mxu0 %v186
  %333 = vmatpush1.bf16.msra.mxu0 %v185
  %334 = vmatprep.subr.bf16.mxu0 %v184
  %335 = vmatpush1.bf16.msra.mxu0 %v183
  %336 = vmatprep.subr.bf16.mxu0 0
  %337 = vmatpush2.bf16.msra.mxu0 0
  %338 = vmatprep.subr.bf16.mxu0 0
  %339 = vmatpush2.bf16.msra.mxu0 0
  %340 = vmatprep.subr.bf16.mxu0 0
  %341 = vmatpush2.bf16.msra.mxu0 0
  %342 = vmatprep.subr.bf16.mxu0 0
  %343 = vmatpush2.bf16.msra.mxu0 0
  %344 = vmatprep.subr.bf16.mxu0 0
  %345 = vmatpush2.bf16.msra.mxu0 0
  %346 = vmatprep.subr.bf16.mxu0 0
  %347 = vmatpush2.bf16.msra.mxu0 0
  %348 = vmatprep.subr.bf16.mxu0 0
  %349 = vmatpush2.bf16.msra.mxu0 0
  %350 = vmatprep.subr.bf16.mxu0 0
  %351 = vmatpush2.bf16.msra.mxu0 0
  %352 = vmatprep.mubr.bf16.mxu0 0
  %353 = vmatmul.mubr.bf16.gmra.mxu0 %v318
  %v354 = vpop.f32.mrf.mxu0
  %v355 = vadd.f32 0.0, %v354
  %v356 = vpop.f32.mrf.mxu0
  %v357 = vadd.f32 0.0, %v356
  %v358 = vpop.f32.mrf.mxu0
  %v359 = vpop.f32.mrf.mxu0
  %360 = vdwg.mxu0
  %v361 = vadd.f32 %v357, %v247
  %v362 = vxor.u32 %v361, 2147483648
  %v363 = vmul.f32 %v362, 1.442695
  %v364 = vpow.pop %v363
  %v365 = vadd.f32 %v364, 1.0
  %v366 = vrcp.pop %v365
  %v367 = vmul.f32 1.0, %v366
  %v368 = vtanh.pop %v361
  %v369 = vmul.f32 %v367, %v266
  %371 = vrot.lane.b32.xlu0 %v368, 32
  %v372 = vpop.permute.xlu0 %371
  %v374 = vmul.f32 %v367, %v372
  %376 = vrot.lane.b32.xlu0 %v374, 32
  %v377 = vpop.permute.xlu0 %376
  %v379 = vadd.f32 %v369, %v377
  %v380 = vtanh.pop %v379
  %382 = vrot.lane.b32.xlu0 %v380, 32
  %v383 = vpop.permute.xlu0 %382
  %v385 = vmul.f32 %v367, %v383
  %v387 = vrot.slane %v355, 4
  %v389 = vadd.f32 %v120, %v387
  %v390 = vxor.u32 %v389, 2147483648
  %v391 = vmul.f32 %v390, 1.442695
  %v392 = vpow.pop %v391
  %v393 = vadd.f32 %v392, 1.0
  %v394 = vrcp.pop %v393
  %v395 = vmul.f32 1.0, %v394
  %v396 = vtanh.pop %v389
  %v398 = vrot.slane %v297, 6
  %v400 = vmul.f32 %v395, %v398
  %402 = vrot.lane.b32.xlu0 %v396, 32
  %v403 = vpop.permute.xlu0 %402
  %v405 = vmul.f32 %v395, %v403
  %407 = vrot.lane.b32.xlu0 %v405, 32
  %v408 = vpop.permute.xlu0 %407
  %v410 = vadd.f32 %v400, %v408
  %v411 = vtanh.pop %v410
  %413 = vrot.lane.b32.xlu0 %v411, 32
  %v414 = vpop.permute.xlu0 %413
  %v416 = vmul.f32 %v395, %v414
  %418 = vrot.lane.b32.xlu0 %v416, 64
  %v419 = vpop.permute.xlu0 %418
  %v422 = vrot.slane %v385, 4
  %423 = vrot.lane.b32.xlu0 %v422, 96
  %v424 = vpop.permute.xlu0 %423
  %v426 = vsel %vm156, %v419, %v424
  %v427 = vpack.c.bf16 %v426, %v426
  %v429 = vrot.slane %v427, 2
  %v431 = vsel %vm199, %v429, 0
  %433 = vmatprep.subr.bf16.mxu0 0
  %434 = vmatpush1.bf16.msra.mxu0 0
  %435 = vmatprep.subr.bf16.mxu0 0
  %436 = vmatpush1.bf16.msra.mxu0 0
  %437 = vmatprep.subr.bf16.mxu0 0
  %438 = vmatpush1.bf16.msra.mxu0 0
  %439 = vmatprep.subr.bf16.mxu0 0
  %440 = vmatpush1.bf16.msra.mxu0 0
  %441 = vmatprep.subr.bf16.mxu0 %v190
  %442 = vmatpush1.bf16.msra.mxu0 %v189
  %443 = vmatprep.subr.bf16.mxu0 %v188
  %444 = vmatpush1.bf16.msra.mxu0 %v187
  %445 = vmatprep.subr.bf16.mxu0 %v186
  %446 = vmatpush1.bf16.msra.mxu0 %v185
  %447 = vmatprep.subr.bf16.mxu0 %v184
  %448 = vmatpush1.bf16.msra.mxu0 %v183
  %449 = vmatprep.subr.bf16.mxu0 0
  %450 = vmatpush2.bf16.msra.mxu0 0
  %451 = vmatprep.subr.bf16.mxu0 0
  %452 = vmatpush2.bf16.msra.mxu0 0
  %453 = vmatprep.subr.bf16.mxu0 0
  %454 = vmatpush2.bf16.msra.mxu0 0
  %455 = vmatprep.subr.bf16.mxu0 0
  %456 = vmatpush2.bf16.msra.mxu0 0
  %457 = vmatprep.subr.bf16.mxu0 0
  %458 = vmatpush2.bf16.msra.mxu0 0
  %459 = vmatprep.subr.bf16.mxu0 0
  %460 = vmatpush2.bf16.msra.mxu0 0
  %461 = vmatprep.subr.bf16.mxu0 0
  %462 = vmatpush2.bf16.msra.mxu0 0
  %463 = vmatprep.subr.bf16.mxu0 0
  %464 = vmatpush2.bf16.msra.mxu0 0
  %465 = vmatprep.mubr.bf16.mxu0 0
  %466 = vmatmul.mubr.bf16.gmra.mxu0 %v431
  %v467 = vpop.f32.mrf.mxu0
  %v468 = vadd.f32 0.0, %v467
  %v469 = vpop.f32.mrf.mxu0
  %v470 = vadd.f32 0.0, %v469
  %v471 = vpop.f32.mrf.mxu0
  %v472 = vpop.f32.mrf.mxu0
  %473 = vdwg.mxu0
  %v474 = vadd.f32 %v470, %v247
  %v475 = vxor.u32 %v474, 2147483648
  %v476 = vmul.f32 %v475, 1.442695
  %v477 = vpow.pop %v476
  %v478 = vadd.f32 %v477, 1.0
  %v479 = vrcp.pop %v478
  %v480 = vmul.f32 1.0, %v479
  %v481 = vtanh.pop %v474
  %v482 = vmul.f32 %v480, %v379
  %484 = vrot.lane.b32.xlu0 %v481, 32
  %v485 = vpop.permute.xlu0 %484
  %v487 = vmul.f32 %v480, %v485
  %489 = vrot.lane.b32.xlu0 %v487, 32
  %v490 = vpop.permute.xlu0 %489
  %v492 = vadd.f32 %v482, %v490
  %v493 = vtanh.pop %v492
  %495 = vrot.lane.b32.xlu0 %v493, 32
  %v496 = vpop.permute.xlu0 %495
  %v498 = vmul.f32 %v480, %v496
  %v500 = vrot.slane %v468, 2
  %v502 = vadd.f32 %v120, %v500
  %v503 = vxor.u32 %v502, 2147483648
  %v504 = vmul.f32 %v503, 1.442695
  %v505 = vpow.pop %v504
  %v506 = vadd.f32 %v505, 1.0
  %v507 = vrcp.pop %v506
  %v508 = vmul.f32 1.0, %v507
  %v509 = vtanh.pop %v502
  %v511 = vrot.slane %v410, 6
  %v513 = vmul.f32 %v508, %v511
  %515 = vrot.lane.b32.xlu0 %v509, 32
  %v516 = vpop.permute.xlu0 %515
  %v518 = vmul.f32 %v508, %v516
  %520 = vrot.lane.b32.xlu0 %v518, 32
  %v521 = vpop.permute.xlu0 %520
  %v523 = vadd.f32 %v513, %v521
  %v524 = vtanh.pop %v523
  %526 = vrot.lane.b32.xlu0 %v524, 32
  %v527 = vpop.permute.xlu0 %526
  %v529 = vmul.f32 %v508, %v527
  %531 = vrot.lane.b32.xlu0 %v529, 64
  %v532 = vpop.permute.xlu0 %531
  %v535 = vrot.slane %v498, 2
  %536 = vrot.lane.b32.xlu0 %v535, 96
  %v537 = vpop.permute.xlu0 %536
  %v539 = vsel %vm156, %v532, %v537
  %v540 = vpack.c.bf16 %v539, %v539
  %v542 = vrot.slane %v540, 3
  %v544 = vsel %vm199, %v542, 0
  %546 = vmatprep.subr.bf16.mxu0 0
  %547 = vmatpush1.bf16.msra.mxu0 0
  %548 = vmatprep.subr.bf16.mxu0 0
  %549 = vmatpush1.bf16.msra.mxu0 0
  %550 = vmatprep.subr.bf16.mxu0 0
  %551 = vmatpush1.bf16.msra.mxu0 0
  %552 = vmatprep.subr.bf16.mxu0 0
  %553 = vmatpush1.bf16.msra.mxu0 0
  %554 = vmatprep.subr.bf16.mxu0 %v190
  %555 = vmatpush1.bf16.msra.mxu0 %v189
  %556 = vmatprep.subr.bf16.mxu0 %v188
  %557 = vmatpush1.bf16.msra.mxu0 %v187
  %558 = vmatprep.subr.bf16.mxu0 %v186
  %559 = vmatpush1.bf16.msra.mxu0 %v185
  %560 = vmatprep.subr.bf16.mxu0 %v184
  %561 = vmatpush1.bf16.msra.mxu0 %v183
  %562 = vmatprep.subr.bf16.mxu0 0
  %563 = vmatpush2.bf16.msra.mxu0 0
  %564 = vmatprep.subr.bf16.mxu0 0
  %565 = vmatpush2.bf16.msra.mxu0 0
  %566 = vmatprep.subr.bf16.mxu0 0
  %567 = vmatpush2.bf16.msra.mxu0 0
  %568 = vmatprep.subr.bf16.mxu0 0
  %569 = vmatpush2.bf16.msra.mxu0 0
  %570 = vmatprep.subr.bf16.mxu0 0
  %571 = vmatpush2.bf16.msra.mxu0 0
  %572 = vmatprep.subr.bf16.mxu0 0
  %573 = vmatpush2.bf16.msra.mxu0 0
  %574 = vmatprep.subr.bf16.mxu0 0
  %575 = vmatpush2.bf16.msra.mxu0 0
  %576 = vmatprep.subr.bf16.mxu0 0
  %577 = vmatpush2.bf16.msra.mxu0 0
  %578 = vmatprep.mubr.bf16.mxu0 0
  %579 = vmatmul.mubr.bf16.gmra.mxu0 %v544
  %v580 = vpop.f32.mrf.mxu0
  %v581 = vadd.f32 0.0, %v580
  %v582 = vpop.f32.mrf.mxu0
  %v583 = vadd.f32 0.0, %v582
  %v584 = vpop.f32.mrf.mxu0
  %v585 = vpop.f32.mrf.mxu0
  %586 = vdwg.mxu0
  %v587 = vadd.f32 %v583, %v247
  %v588 = vxor.u32 %v587, 2147483648
  %v589 = vmul.f32 %v588, 1.442695
  %v590 = vpow.pop %v589
  %v591 = vadd.f32 %v590, 1.0
  %v592 = vrcp.pop %v591
  %v593 = vmul.f32 1.0, %v592
  %v594 = vtanh.pop %v587
  %v595 = vmul.f32 %v593, %v492
  %597 = vrot.lane.b32.xlu0 %v594, 32
  %v598 = vpop.permute.xlu0 %597
  %v600 = vmul.f32 %v593, %v598
  %602 = vrot.lane.b32.xlu0 %v600, 32
  %v603 = vpop.permute.xlu0 %602
  %v605 = vadd.f32 %v595, %v603
  %v606 = vtanh.pop %v605
  %608 = vrot.lane.b32.xlu0 %v606, 32
  %v609 = vpop.permute.xlu0 %608
  %v611 = vmul.f32 %v593, %v609
  %v612 = vadd.f32 %v125, %v581
  %v613 = vxor.u32 %v612, 2147483648
  %v614 = vmul.f32 %v613, 1.442695
  %v615 = vpow.pop %v614
  %v616 = vadd.f32 %v615, 1.0
  %v617 = vrcp.pop %v616
  %v618 = vmul.f32 1.0, %v617
  %v619 = vtanh.pop %v612
  %v621 = vrot.slane %v523, 6
  %v623 = vmul.f32 %v618, %v621
  %625 = vrot.lane.b32.xlu0 %v619, 32
  %v626 = vpop.permute.xlu0 %625
  %v628 = vmul.f32 %v618, %v626
  %630 = vrot.lane.b32.xlu0 %v628, 32
  %v631 = vpop.permute.xlu0 %630
  %v633 = vadd.f32 %v623, %v631
  %v634 = vtanh.pop %v633
  %636 = vrot.lane.b32.xlu0 %v634, 32
  %v637 = vpop.permute.xlu0 %636
  %v639 = vmul.f32 %v618, %v637
  %641 = vrot.lane.b32.xlu0 %v639, 64
  %v642 = vpop.permute.xlu0 %641
  %645 = vrot.lane.b32.xlu0 %v611, 96
  %v646 = vpop.permute.xlu0 %645
  %v648 = vsel %vm156, %v642, %v646
  %v649 = vpack.c.bf16 %v648, %v648
  %v651 = vsel %vm199, %v649, 0
  %653 = vmatprep.subr.bf16.mxu0 0
  %654 = vmatpush1.bf16.msra.mxu0 0
  %655 = vmatprep.subr.bf16.mxu0 0
  %656 = vmatpush1.bf16.msra.mxu0 0
  %657 = vmatprep.subr.bf16.mxu0 0
  %658 = vmatpush1.bf16.msra.mxu0 0
  %659 = vmatprep.subr.bf16.mxu0 0
  %660 = vmatpush1.bf16.msra.mxu0 0
  %661 = vmatprep.subr.bf16.mxu0 %v190
  %662 = vmatpush1.bf16.msra.mxu0 %v189
  %663 = vmatprep.subr.bf16.mxu0 %v188
  %664 = vmatpush1.bf16.msra.mxu0 %v187
  %665 = vmatprep.subr.bf16.mxu0 %v186
  %666 = vmatpush1.bf16.msra.mxu0 %v185
  %667 = vmatprep.subr.bf16.mxu0 %v184
  %668 = vmatpush1.bf16.msra.mxu0 %v183
  %669 = vmatprep.subr.bf16.mxu0 0
  %670 = vmatpush2.bf16.msra.mxu0 0
  %671 = vmatprep.subr.bf16.mxu0 0
  %672 = vmatpush2.bf16.msra.mxu0 0
  %673 = vmatprep.subr.bf16.mxu0 0
  %674 = vmatpush2.bf16.msra.mxu0 0
  %675 = vmatprep.subr.bf16.mxu0 0
  %676 = vmatpush2.bf16.msra.mxu0 0
  %677 = vmatprep.subr.bf16.mxu0 0
  %678 = vmatpush2.bf16.msra.mxu0 0
  %679 = vmatprep.subr.bf16.mxu0 0
  %680 = vmatpush2.bf16.msra.mxu0 0
  %681 = vmatprep.subr.bf16.mxu0 0
  %682 = vmatpush2.bf16.msra.mxu0 0
  %683 = vmatprep.subr.bf16.mxu0 0
  %684 = vmatpush2.bf16.msra.mxu0 0
  %685 = vmatprep.mubr.bf16.mxu0 0
  %686 = vmatmul.mubr.bf16.gmra.mxu0 %v651
  %v687 = vpop.f32.mrf.mxu0
  %v688 = vadd.f32 0.0, %v687
  %v689 = vpop.f32.mrf.mxu0
  %v690 = vadd.f32 0.0, %v689
  %v691 = vpop.f32.mrf.mxu0
  %v692 = vpop.f32.mrf.mxu0
  %693 = vdwg.mxu0
  %v694 = vadd.f32 %v690, %v247
  %v695 = vxor.u32 %v694, 2147483648
  %v696 = vmul.f32 %v695, 1.442695
  %v697 = vpow.pop %v696
  %v698 = vadd.f32 %v697, 1.0
  %v699 = vrcp.pop %v698
  %v700 = vmul.f32 1.0, %v699
  %v701 = vtanh.pop %v694
  %v702 = vmul.f32 %v700, %v605
  %704 = vrot.lane.b32.xlu0 %v701, 32
  %v705 = vpop.permute.xlu0 %704
  %v707 = vmul.f32 %v700, %v705
  %709 = vrot.lane.b32.xlu0 %v707, 32
  %v710 = vpop.permute.xlu0 %709
  %v712 = vadd.f32 %v702, %v710
  %v713 = vtanh.pop %v712
  %715 = vrot.lane.b32.xlu0 %v713, 32
  %v716 = vpop.permute.xlu0 %715
  %v718 = vmul.f32 %v700, %v716
  %v720 = vrot.slane %v688, 6
  %v722 = vadd.f32 %v125, %v720
  %v723 = vxor.u32 %v722, 2147483648
  %v724 = vmul.f32 %v723, 1.442695
  %v725 = vpow.pop %v724
  %v726 = vadd.f32 %v725, 1.0
  %v727 = vrcp.pop %v726
  %v728 = vmul.f32 1.0, %v727
  %v729 = vtanh.pop %v722
  %v731 = vrot.slane %v633, 6
  %v733 = vmul.f32 %v728, %v731
  %735 = vrot.lane.b32.xlu0 %v729, 32
  %v736 = vpop.permute.xlu0 %735
  %v738 = vmul.f32 %v728, %v736
  %740 = vrot.lane.b32.xlu0 %v738, 32
  %v741 = vpop.permute.xlu0 %740
  %v743 = vadd.f32 %v733, %v741
  %v744 = vtanh.pop %v743
  %746 = vrot.lane.b32.xlu0 %v744, 32
  %v747 = vpop.permute.xlu0 %746
  %v749 = vmul.f32 %v728, %v747
  %751 = vrot.lane.b32.xlu0 %v749, 64
  %v752 = vpop.permute.xlu0 %751
  %v755 = vrot.slane %v718, 6
  %756 = vrot.lane.b32.xlu0 %v755, 96
  %v757 = vpop.permute.xlu0 %756
  %v759 = vsel %vm156, %v752, %v757
  %v760 = vpack.c.bf16 %v759, %v759
  %v762 = vrot.slane %v760, 1
  %v764 = vsel %vm199, %v762, 0
  %766 = vmatprep.subr.bf16.mxu0 0
  %767 = vmatpush1.bf16.msra.mxu0 0
  %768 = vmatprep.subr.bf16.mxu0 0
  %769 = vmatpush1.bf16.msra.mxu0 0
  %770 = vmatprep.subr.bf16.mxu0 0
  %771 = vmatpush1.bf16.msra.mxu0 0
  %772 = vmatprep.subr.bf16.mxu0 0
  %773 = vmatpush1.bf16.msra.mxu0 0
  %774 = vmatprep.subr.bf16.mxu0 %v190
  %775 = vmatpush1.bf16.msra.mxu0 %v189
  %776 = vmatprep.subr.bf16.mxu0 %v188
  %777 = vmatpush1.bf16.msra.mxu0 %v187
  %778 = vmatprep.subr.bf16.mxu0 %v186
  %779 = vmatpush1.bf16.msra.mxu0 %v185
  %780 = vmatprep.subr.bf16.mxu0 %v184
  %781 = vmatpush1.bf16.msra.mxu0 %v183
  %782 = vmatprep.subr.bf16.mxu0 0
  %783 = vmatpush2.bf16.msra.mxu0 0
  %784 = vmatprep.subr.bf16.mxu0 0
  %785 = vmatpush2.bf16.msra.mxu0 0
  %786 = vmatprep.subr.bf16.mxu0 0
  %787 = vmatpush2.bf16.msra.mxu0 0
  %788 = vmatprep.subr.bf16.mxu0 0
  %789 = vmatpush2.bf16.msra.mxu0 0
  %790 = vmatprep.subr.bf16.mxu0 0
  %791 = vmatpush2.bf16.msra.mxu0 0
  %792 = vmatprep.subr.bf16.mxu0 0
  %793 = vmatpush2.bf16.msra.mxu0 0
  %794 = vmatprep.subr.bf16.mxu0 0
  %795 = vmatpush2.bf16.msra.mxu0 0
  %796 = vmatprep.subr.bf16.mxu0 0
  %797 = vmatpush2.bf16.msra.mxu0 0
  %798 = vmatprep.mubr.bf16.mxu0 0
  %799 = vmatmul.mubr.bf16.gmra.mxu0 %v764
  %v800 = vpop.f32.mrf.mxu0
  %v801 = vadd.f32 0.0, %v800
  %v802 = vpop.f32.mrf.mxu0
  %v803 = vadd.f32 0.0, %v802
  %v804 = vpop.f32.mrf.mxu0
  %v805 = vpop.f32.mrf.mxu0
  %806 = vdwg.mxu0
  %v807 = vadd.f32 %v803, %v247
  %v808 = vxor.u32 %v807, 2147483648
  %v809 = vmul.f32 %v808, 1.442695
  %v810 = vpow.pop %v809
  %v811 = vadd.f32 %v810, 1.0
  %v812 = vrcp.pop %v811
  %v813 = vmul.f32 1.0, %v812
  %v814 = vtanh.pop %v807
  %v815 = vmul.f32 %v813, %v712
  %817 = vrot.lane.b32.xlu0 %v814, 32
  %v818 = vpop.permute.xlu0 %817
  %v820 = vmul.f32 %v813, %v818
  %822 = vrot.lane.b32.xlu0 %v820, 32
  %v823 = vpop.permute.xlu0 %822
  %v825 = vadd.f32 %v815, %v823
  %v826 = vtanh.pop %v825
  %828 = vrot.lane.b32.xlu0 %v826, 32
  %v829 = vpop.permute.xlu0 %828
  %v831 = vmul.f32 %v813, %v829
  %v833 = vrot.slane %v801, 4
  %v835 = vadd.f32 %v125, %v833
  %v836 = vxor.u32 %v835, 2147483648
  %v837 = vmul.f32 %v836, 1.442695
  %v838 = vpow.pop %v837
  %v839 = vadd.f32 %v838, 1.0
  %v840 = vrcp.pop %v839
  %v841 = vmul.f32 1.0, %v840
  %v842 = vtanh.pop %v835
  %v844 = vrot.slane %v743, 6
  %v846 = vmul.f32 %v841, %v844
  %848 = vrot.lane.b32.xlu0 %v842, 32
  %v849 = vpop.permute.xlu0 %848
  %v851 = vmul.f32 %v841, %v849
  %853 = vrot.lane.b32.xlu0 %v851, 32
  %v854 = vpop.permute.xlu0 %853
  %v856 = vadd.f32 %v846, %v854
  %v857 = vtanh.pop %v856
  %859 = vrot.lane.b32.xlu0 %v857, 32
  %v860 = vpop.permute.xlu0 %859
  %v862 = vmul.f32 %v841, %v860
  %864 = vrot.lane.b32.xlu0 %v862, 64
  %v865 = vpop.permute.xlu0 %864
  %v868 = vrot.slane %v831, 4
  %869 = vrot.lane.b32.xlu0 %v868, 96
  %v870 = vpop.permute.xlu0 %869
  %v872 = vsel %vm156, %v865, %v870
  %v873 = vpack.c.bf16 %v872, %v872
  %v875 = vrot.slane %v873, 2
  %v877 = vsel %vm199, %v875, 0
  %879 = vmatprep.subr.bf16.mxu0 0
  %880 = vmatpush1.bf16.msra.mxu0 0
  %881 = vmatprep.subr.bf16.mxu0 0
  %882 = vmatpush1.bf16.msra.mxu0 0
  %883 = vmatprep.subr.bf16.mxu0 0
  %884 = vmatpush1.bf16.msra.mxu0 0
  %885 = vmatprep.subr.bf16.mxu0 0
  %886 = vmatpush1.bf16.msra.mxu0 0
  %887 = vmatprep.subr.bf16.mxu0 %v190
  %888 = vmatpush1.bf16.msra.mxu0 %v189
  %889 = vmatprep.subr.bf16.mxu0 %v188
  %890 = vmatpush1.bf16.msra.mxu0 %v187
  %891 = vmatprep.subr.bf16.mxu0 %v186
  %892 = vmatpush1.bf16.msra.mxu0 %v185
  %893 = vmatprep.subr.bf16.mxu0 %v184
  %894 = vmatpush1.bf16.msra.mxu0 %v183
  %895 = vmatprep.subr.bf16.mxu0 0
  %896 = vmatpush2.bf16.msra.mxu0 0
  %897 = vmatprep.subr.bf16.mxu0 0
  %898 = vmatpush2.bf16.msra.mxu0 0
  %899 = vmatprep.subr.bf16.mxu0 0
  %900 = vmatpush2.bf16.msra.mxu0 0
  %901 = vmatprep.subr.bf16.mxu0 0
  %902 = vmatpush2.bf16.msra.mxu0 0
  %903 = vmatprep.subr.bf16.mxu0 0
  %904 = vmatpush2.bf16.msra.mxu0 0
  %905 = vmatprep.subr.bf16.mxu0 0
  %906 = vmatpush2.bf16.msra.mxu0 0
  %907 = vmatprep.subr.bf16.mxu0 0
  %908 = vmatpush2.bf16.msra.mxu0 0
  %909 = vmatprep.subr.bf16.mxu0 0
  %910 = vmatpush2.bf16.msra.mxu0 0
  %911 = vmatprep.mubr.bf16.mxu0 0
  %912 = vmatmul.mubr.bf16.gmra.mxu0 %v877
  %v913 = vpop.f32.mrf.mxu0
  %v914 = vadd.f32 0.0, %v913
  %v915 = vpop.f32.mrf.mxu0
  %v916 = vadd.f32 0.0, %v915
  %v917 = vpop.f32.mrf.mxu0
  %v918 = vpop.f32.mrf.mxu0
  %919 = vdwg.mxu0
  %v920 = vadd.f32 %v916, %v247
  %v921 = vxor.u32 %v920, 2147483648
  %v922 = vmul.f32 %v921, 1.442695
  %v923 = vpow.pop %v922
  %v924 = vadd.f32 %v923, 1.0
  %v925 = vrcp.pop %v924
  %v926 = vmul.f32 1.0, %v925
  %v927 = vtanh.pop %v920
  %v928 = vmul.f32 %v926, %v825
  %930 = vrot.lane.b32.xlu0 %v927, 32
  %v931 = vpop.permute.xlu0 %930
  %v933 = vmul.f32 %v926, %v931
  %935 = vrot.lane.b32.xlu0 %v933, 32
  %v936 = vpop.permute.xlu0 %935
  %v938 = vadd.f32 %v928, %v936
  %v939 = vtanh.pop %v938
  %941 = vrot.lane.b32.xlu0 %v939, 32
  %v942 = vpop.permute.xlu0 %941
  %v944 = vmul.f32 %v926, %v942
  %v946 = vrot.slane %v914, 2
  %v948 = vadd.f32 %v125, %v946
  %v949 = vxor.u32 %v948, 2147483648
  %v950 = vmul.f32 %v949, 1.442695
  %v951 = vpow.pop %v950
  %v952 = vadd.f32 %v951, 1.0
  %v953 = vrcp.pop %v952
  %v954 = vmul.f32 1.0, %v953
  %v955 = vtanh.pop %v948
  %v957 = vrot.slane %v856, 6
  %v959 = vmul.f32 %v954, %v957
  %961 = vrot.lane.b32.xlu0 %v955, 32
  %v962 = vpop.permute.xlu0 %961
  %v964 = vmul.f32 %v954, %v962
  %966 = vrot.lane.b32.xlu0 %v964, 32
  %v967 = vpop.permute.xlu0 %966
  %v969 = vadd.f32 %v959, %v967
  %v970 = vtanh.pop %v969
  %972 = vrot.lane.b32.xlu0 %v970, 32
  %v973 = vpop.permute.xlu0 %972
  %v975 = vmul.f32 %v954, %v973
  %977 = vrot.lane.b32.xlu0 %v975, 64
  %v978 = vpop.permute.xlu0 %977
  %v981 = vrot.slane %v944, 2
  %982 = vrot.lane.b32.xlu0 %v981, 96
  %v983 = vpop.permute.xlu0 %982
  %v985 = vsel %vm156, %v978, %v983
  %v986 = vpack.c.bf16 %v985, %v985
  %v988 = vrot.slane %v986, 3
  %v990 = vsel %vm199, %v988, 0
  %992 = vmatprep.subr.bf16.mxu0 0
  %993 = vmatpush1.bf16.msra.mxu0 0
  %994 = vmatprep.subr.bf16.mxu0 0
  %995 = vmatpush1.bf16.msra.mxu0 0
  %996 = vmatprep.subr.bf16.mxu0 0
  %997 = vmatpush1.bf16.msra.mxu0 0
  %998 = vmatprep.subr.bf16.mxu0 0
  %999 = vmatpush1.bf16.msra.mxu0 0
  %1000 = vmatprep.subr.bf16.mxu0 %v190
  %1001 = vmatpush1.bf16.msra.mxu0 %v189
  %1002 = vmatprep.subr.bf16.mxu0 %v188
  %1003 = vmatpush1.bf16.msra.mxu0 %v187
  %1004 = vmatprep.subr.bf16.mxu0 %v186
  %1005 = vmatpush1.bf16.msra.mxu0 %v185
  %1006 = vmatprep.subr.bf16.mxu0 %v184
  %1007 = vmatpush1.bf16.msra.mxu0 %v183
  %1008 = vmatprep.subr.bf16.mxu0 0
  %1009 = vmatpush2.bf16.msra.mxu0 0
  %1010 = vmatprep.subr.bf16.mxu0 0
  %1011 = vmatpush2.bf16.msra.mxu0 0
  %1012 = vmatprep.subr.bf16.mxu0 0
  %1013 = vmatpush2.bf16.msra.mxu0 0
  %1014 = vmatprep.subr.bf16.mxu0 0
  %1015 = vmatpush2.bf16.msra.mxu0 0
  %1016 = vmatprep.subr.bf16.mxu0 0
  %1017 = vmatpush2.bf16.msra.mxu0 0
  %1018 = vmatprep.subr.bf16.mxu0 0
  %1019 = vmatpush2.bf16.msra.mxu0 0
  %1020 = vmatprep.subr.bf16.mxu0 0
  %1021 = vmatpush2.bf16.msra.mxu0 0
  %1022 = vmatprep.subr.bf16.mxu0 0
  %1023 = vmatpush2.bf16.msra.mxu0 0
  %1024 = vmatprep.mubr.bf16.mxu0 0
  %1025 = vmatmul.mubr.bf16.gmra.mxu0 %v990
  %v1026 = vpop.f32.mrf.mxu0
  %v1027 = vpop.f32.mrf.mxu0
  %v1028 = vadd.f32 0.0, %v1027
  %v1029 = vpop.f32.mrf.mxu0
  %v1030 = vpop.f32.mrf.mxu0
  %1031 = vdwg.mxu0
  %v1032 = vadd.f32 %v1028, %v247
  %v1033 = vxor.u32 %v1032, 2147483648
  %v1034 = vmul.f32 %v1033, 1.442695
  %v1035 = vpow.pop %v1034
  %v1036 = vadd.f32 %v1035, 1.0
  %v1037 = vrcp.pop %v1036
  %v1038 = vmul.f32 1.0, %v1037
  %v1039 = vtanh.pop %v1032
  %v1040 = vmul.f32 %v1038, %v938
  %1042 = vrot.lane.b32.xlu0 %v1039, 32
  %v1043 = vpop.permute.xlu0 %1042
  %v1045 = vmul.f32 %v1038, %v1043
  %1047 = vrot.lane.b32.xlu0 %v1045, 32
  %v1048 = vpop.permute.xlu0 %1047
  %v1050 = vadd.f32 %v1040, %v1048
  %v1051 = vtanh.pop %v1050
  %1053 = vrot.lane.b32.xlu0 %v1051, 32
  %v1054 = vpop.permute.xlu0 %1053
  %v1056 = vmul.f32 %v1038, %v1054
  %v1057 = vrot.slane %v385, 6
  %v1059 = vrot.slane %v498, 4
  %v1061 = vrot.slane %v611, 2
  %v1063 = vrot.slane %v831, 6
  %v1065 = vrot.slane %v944, 4
  %v1068 = vrot.slane %v1056, 2
  %vm1070 = vcmask 1041408
  %v1071 = vsel %vm1070, %v272, %v1057
  %vm1072 = vcmask 1043456
  %v1073 = vsel %vm1072, %v1071, %v1059
  %vm1074 = vcmask 1045504
  %v1075 = vsel %vm1074, %v1073, %v1061
  %v1076 = vsel %vm1070, %v718, %v1063
  %v1077 = vsel %vm1072, %v1076, %v1065
  %v1078 = vsel %vm1074, %v1077, %v1068
  %v1079 = vlaneseq
  %v1080 = vshrl.u32 %v1079, 7
  %v1081 = vsub.s32 0, %v1080
  %v1082 = vrot.slane %v30, %v1081
  %1085 = vrot.lane.b32.xlu0 %v1075, 64
  %v1086 = vpop.permute.xlu0 %1085
  %1087 = vrot.lane.b32.xlu0 %v1078, 64
  %v1088 = vpop.permute.xlu0 %1087
  %v1089 = vsel %vm156, %v1086, 0
  %v1091 = vsel %vm156, %v1088, 0
  %1093 = vmatprep.subr.mxu0 0.0
  %1094 = vmatpush1.msra.mxu0 0.0
  %1095 = vmatprep.subr.mxu0 0.0
  %1096 = vmatpush1.msra.mxu0 0.0
  %1097 = vmatprep.subr.mxu0 0.0
  %1098 = vmatpush1.msra.mxu0 0.0
  %1099 = vmatprep.subr.mxu0 0.0
  %1100 = vmatpush1.msra.mxu0 0.0
  %1101 = vmatprep.subr.mxu0 0.0
  %1102 = vmatpush1.msra.mxu0 0.0
  %1103 = vmatprep.subr.mxu0 0.0
  %1104 = vmatpush1.msra.mxu0 0.0
  %1105 = vmatprep.subr.mxu0 0.0
  %1106 = vmatpush1.msra.mxu0 0.0
  %1107 = vmatprep.subr.mxu0 0.0
  %1108 = vmatpush1.msra.mxu0 0.0
  %1109 = vmatprep.subr.mxu0 0.0
  %1110 = vmatpush1.msra.mxu0 0.0
  %1111 = vmatprep.subr.mxu0 0.0
  %1112 = vmatpush1.msra.mxu0 0.0
  %1113 = vmatprep.subr.mxu0 0.0
  %1114 = vmatpush1.msra.mxu0 0.0
  %1115 = vmatprep.subr.mxu0 0.0
  %1116 = vmatpush1.msra.mxu0 0.0
  %1117 = vmatprep.subr.mxu0 0.0
  %1118 = vmatpush1.msra.mxu0 %v29
  %1119 = vmatprep.subr.mxu0 0.0
  %1120 = vmatpush1.msra.mxu0 %v28
  %1121 = vmatprep.subr.mxu0 0.0
  %1122 = vmatpush1.msra.mxu0 %v27
  %1123 = vmatprep.subr.mxu0 0.0
  %1124 = vmatpush1.msra.mxu0 %v26
  %1125 = vmatprep.subr.mxu0 0.0
  %1126 = vmatpush2.msra.mxu0 0.0
  %1127 = vmatprep.subr.mxu0 0.0
  %1128 = vmatpush2.msra.mxu0 0.0
  %1129 = vmatprep.subr.mxu0 0.0
  %1130 = vmatpush2.msra.mxu0 0.0
  %1131 = vmatprep.subr.mxu0 0.0
  %1132 = vmatpush2.msra.mxu0 0.0
  %1133 = vmatprep.subr.mxu0 0.0
  %1134 = vmatpush2.msra.mxu0 0.0
  %1135 = vmatprep.subr.mxu0 0.0
  %1136 = vmatpush2.msra.mxu0 0.0
  %1137 = vmatprep.subr.mxu0 0.0
  %1138 = vmatpush2.msra.mxu0 0.0
  %1139 = vmatprep.subr.mxu0 0.0
  %1140 = vmatpush2.msra.mxu0 0.0
  %1141 = vmatprep.subr.mxu0 0.0
  %1142 = vmatpush2.msra.mxu0 0.0
  %1143 = vmatprep.subr.mxu0 0.0
  %1144 = vmatpush2.msra.mxu0 0.0
  %1145 = vmatprep.subr.mxu0 0.0
  %1146 = vmatpush2.msra.mxu0 0.0
  %1147 = vmatprep.subr.mxu0 0.0
  %1148 = vmatpush2.msra.mxu0 0.0
  %1149 = vmatprep.subr.mxu0 0.0
  %1150 = vmatpush2.msra.mxu0 0.0
  %1151 = vmatprep.subr.mxu0 0.0
  %1152 = vmatpush2.msra.mxu0 0.0
  %1153 = vmatprep.subr.mxu0 0.0
  %1154 = vmatpush2.msra.mxu0 0.0
  %1155 = vmatprep.subr.mxu0 0.0
  %1156 = vmatpush2.msra.mxu0 0.0
  %1157 = vmatprep.mubr.f32.mxu0 0.0
  %1158 = vmatmul.mubr.f32.gmra.mxu0 %v1089
  %v1159 = vpop.f32.mrf.mxu0
  %v1160 = vadd.f32 %v1082, %v1159
  %v1161 = vpop.f32.mrf.mxu0
  %1162 = vmatprep.mubr.f32.mxu0 0.0
  %1163 = vmatmul.mubr.f32.gmra.mxu0 %v1091
  %v1164 = vpop.f32.mrf.mxu0
  %v1165 = vadd.f32 %v1082, %v1164
  %v1166 = vpop.f32.mrf.mxu0
  %1167 = vdwg.mxu0
  %v1168 = vmax.f32 %v1160, 0.0
  %v1169 = vmax.f32 %v1165, 0.0
  %v1170 = vlaneseq
  %v1171 = vshrl.u32 %v1170, 7
  %v1172 = vsub.s32 0, %v1171
  %v1173 = vrot.slane %v32, %v1172
  %vm1174 = vcmask 31744
  %v1176 = vsel %vm1174, %v40, 0
  %v1179 = vsel %vm1174, %v41, 0
  %v1182 = vsel %vm1072, %v31, 0
  %1184 = vmatprep.subr.mxu0 0.0
  %1185 = vmatpush1.msra.mxu0 0.0
  %1186 = vmatprep.subr.mxu0 0.0
  %1187 = vmatpush1.msra.mxu0 0.0
  %1188 = vmatprep.subr.mxu0 0.0
  %1189 = vmatpush1.msra.mxu0 0.0
  %1190 = vmatprep.subr.mxu0 0.0
  %1191 = vmatpush1.msra.mxu0 0.0
  %1192 = vmatprep.subr.mxu0 0.0
  %1193 = vmatpush1.msra.mxu0 0.0
  %1194 = vmatprep.subr.mxu0 0.0
  %1195 = vmatpush1.msra.mxu0 0.0
  %1196 = vmatprep.subr.mxu0 0.0
  %1197 = vmatpush1.msra.mxu0 0.0
  %1198 = vmatprep.subr.mxu0 0.0
  %1199 = vmatpush1.msra.mxu0 0.0
  %1200 = vmatprep.subr.mxu0 0.0
  %1201 = vmatpush1.msra.mxu0 0.0
  %1202 = vmatprep.subr.mxu0 0.0
  %1203 = vmatpush1.msra.mxu0 0.0
  %1204 = vmatprep.subr.mxu0 0.0
  %1205 = vmatpush1.msra.mxu0 0.0
  %1206 = vmatprep.subr.mxu0 0.0
  %1207 = vmatpush1.msra.mxu0 0.0
  %1208 = vmatprep.subr.mxu0 0.0
  %1209 = vmatpush1.msra.mxu0 0.0
  %1210 = vmatprep.subr.mxu0 0.0
  %1211 = vmatpush1.msra.mxu0 0.0
  %1212 = vmatprep.subr.mxu0 0.0
  %1213 = vmatpush1.msra.mxu0 0.0
  %1214 = vmatprep.subr.mxu0 0.0
  %1215 = vmatpush1.msra.mxu0 %v1182
  %1216 = vmatprep.subr.mxu0 0.0
  %1217 = vmatpush2.msra.mxu0 0.0
  %1218 = vmatprep.subr.mxu0 0.0
  %1219 = vmatpush2.msra.mxu0 0.0
  %1220 = vmatprep.subr.mxu0 0.0
  %1221 = vmatpush2.msra.mxu0 0.0
  %1222 = vmatprep.subr.mxu0 0.0
  %1223 = vmatpush2.msra.mxu0 0.0
  %1224 = vmatprep.subr.mxu0 0.0
  %1225 = vmatpush2.msra.mxu0 0.0
  %1226 = vmatprep.subr.mxu0 0.0
  %1227 = vmatpush2.msra.mxu0 0.0
  %1228 = vmatprep.subr.mxu0 0.0
  %1229 = vmatpush2.msra.mxu0 0.0
  %1230 = vmatprep.subr.mxu0 0.0
  %1231 = vmatpush2.msra.mxu0 0.0
  %1232 = vmatprep.subr.mxu0 0.0
  %1233 = vmatpush2.msra.mxu0 0.0
  %1234 = vmatprep.subr.mxu0 0.0
  %1235 = vmatpush2.msra.mxu0 0.0
  %1236 = vmatprep.subr.mxu0 0.0
  %1237 = vmatpush2.msra.mxu0 0.0
  %1238 = vmatprep.subr.mxu0 0.0
  %1239 = vmatpush2.msra.mxu0 0.0
  %1240 = vmatprep.subr.mxu0 0.0
  %1241 = vmatpush2.msra.mxu0 0.0
  %1242 = vmatprep.subr.mxu0 0.0
  %1243 = vmatpush2.msra.mxu0 0.0
  %1244 = vmatprep.subr.mxu0 0.0
  %1245 = vmatpush2.msra.mxu0 0.0
  %1246 = vmatprep.subr.mxu0 0.0
  %1247 = vmatpush2.msra.mxu0 0.0
  %1248 = vmatprep.mubr.f32.mxu0 0.0
  %1249 = vmatmul.mubr.f32.gmra.mxu0 %v1176
  %v1250 = vpop.f32.mrf.mxu0
  %v1251 = vadd.f32 %v1173, %v1250
  %v1252 = vpop.f32.mrf.mxu0
  %1253 = vmatprep.mubr.f32.mxu0 0.0
  %1254 = vmatmul.mubr.f32.gmra.mxu0 %v1179
  %v1255 = vpop.f32.mrf.mxu0
  %v1256 = vadd.f32 %v1173, %v1255
  %v1257 = vpop.f32.mrf.mxu0
  %1258 = vdwg.mxu0
  %v1259 = vmax.f32 %v1251, 0.0
  %v1260 = vmax.f32 %v1256, 0.0
  %v1263 = vcombine.high %v1168, %v1168
  %v1265 = vunpack.c.l.s4 1983009808
  %v1266 = vunpack.c.0.s8 %v1265
  %v1267 = vlaneseq
  %v1268 = vshrl.u32 %v1267, 7
  %v1269 = vsub.s32 %v1266, %v1268
  %v1270 = vrot.slane %v1168, %v1269
  %v1272 = vunpack.c.l.s4 1983009808
  %v1273 = vunpack.c.0.s8 %v1272
  %v1274 = vlaneseq
  %v1275 = vshrl.u32 %v1274, 7
  %v1276 = vsub.s32 %v1273, %v1275
  %v1277 = vrot.slane %v1263, %v1276
  %v1278 = vcombine.high %v1270, %v1270
  %v1279 = vcombine.high %v1277, %v1277
  %v1280 = vcombine.high %v1169, %v1169
  %v1282 = vunpack.c.l.s4 1983009808
  %v1283 = vunpack.c.0.s8 %v1282
  %v1284 = vlaneseq
  %v1285 = vshrl.u32 %v1284, 7
  %v1286 = vsub.s32 %v1283, %v1285
  %v1287 = vrot.slane %v1169, %v1286
  %v1289 = vunpack.c.l.s4 1983009808
  %v1290 = vunpack.c.0.s8 %v1289
  %v1291 = vlaneseq
  %v1292 = vshrl.u32 %v1291, 7
  %v1293 = vsub.s32 %v1290, %v1292
  %v1294 = vrot.slane %v1280, %v1293
  %v1295 = vcombine.high %v1287, %v1287
  %v1296 = vcombine.high %v1294, %v1294
  %vm1305 = vcmask 254976
  %v1306 = vsel %vm1305, %v1270, 0.0
  %v1307 = vsel %vm1305, %v1278, 0.0
  %v1308 = vadd.f32 %v1306, %v1307
  %v1309 = vsel %vm1305, %v1277, 0.0
  %v1310 = vadd.f32 %v1308, %v1309
  %v1311 = vsel %vm1305, %v1279, 0.0
  %v1312 = vadd.f32 %v1310, %v1311
  %v1313 = vsel %vm1305, %v1287, 0.0
  %v1314 = vadd.f32 %v1312, %v1313
  %v1315 = vsel %vm1305, %v1295, 0.0
  %v1316 = vadd.f32 %v1314, %v1315
  %v1317 = vsel %vm1305, %v1294, 0.0
  %v1318 = vadd.f32 %v1316, %v1317
  %v1319 = vsel %vm1305, %v1296, 0.0
  %v1320 = vadd.f32 %v1318, %v1319
  %v1323 = vcombine.high %v1259, %v1259
  %v1325 = vunpack.c.l.s4 1983009808
  %v1326 = vunpack.c.0.s8 %v1325
  %v1327 = vlaneseq
  %v1328 = vshrl.u32 %v1327, 7
  %v1329 = vsub.s32 %v1326, %v1328
  %v1330 = vrot.slane %v1259, %v1329
  %v1332 = vunpack.c.l.s4 1983009808
  %v1333 = vunpack.c.0.s8 %v1332
  %v1334 = vlaneseq
  %v1335 = vshrl.u32 %v1334, 7
  %v1336 = vsub.s32 %v1333, %v1335
  %v1337 = vrot.slane %v1323, %v1336
  %v1338 = vcombine.high %v1330, %v1330
  %v1339 = vcombine.high %v1337, %v1337
  %v1341 = vunpack.c.l.s4 1983009808
  %v1342 = vunpack.c.0.s8 %v1341
  %v1343 = vlaneseq
  %v1344 = vshrl.u32 %v1343, 7
  %v1345 = vsub.s32 %v1342, %v1344
  %v1346 = vrot.slane %v1260, %v1345
  %v1347 = vcombine.high %v1346, %v1346
  %v1354 = vsel %vm1305, %v1330, 0.0
  %v1355 = vsel %vm1305, %v1338, 0.0
  %v1356 = vadd.f32 %v1354, %v1355
  %v1357 = vsel %vm1305, %v1337, 0.0
  %v1358 = vadd.f32 %v1356, %v1357
  %v1359 = vsel %vm1305, %v1339, 0.0
  %v1360 = vadd.f32 %v1358, %v1359
  %v1361 = vsel %vm1305, %v1346, 0.0
  %v1362 = vadd.f32 %v1360, %v1361
  %v1363 = vsel %vm1305, %v1347, 0.0
  %v1364 = vadd.f32 %v1362, %v1363
  %v1365 = vadd.f32 %v1320, %v1364
  %v1366 = vmul.f32 %v1365, 0.071428575
  %v1367 = vsel %vm1305, %v1366, 0.0
  %1368 = vadd.xlane.f32.xlu0 %v1367
  %v1369 = vpop.xlane.xlu0 %1368
  %v1370 = vrcp.pop 32.0
  %v1371 = vmul.f32 %v1369, %v1370
  %v1372 = vsub.f32 %v1366, %v1371
  %v1373 = vmul.f32 %v1372, %v1372
  %v1374 = vsel %vm1305, %v1373, 0.0
  %1375 = vadd.xlane.f32.xlu0 %v1374
  %v1376 = vpop.xlane.xlu0 %1375
  %v1377 = vmul.f32 %v1376, %v1370
  %v1378 = vadd.f32 %v1377, 1e-05
  %v1379 = vrsqrt.pop %v1378
  %v1380 = vmul.f32 %v1372, %v1379
  %v1381 = vlaneseq
  %v1382 = vshrl.u32 %v1381, 7
  %v1383 = vsub.s32 0, %v1382
  %v1384 = vrot.slane %v37, %v1383
  %v1386 = vsel %vm156, %v1380, 0
  %1388 = vmatprep.subr.mxu0 0.0
  %1389 = vmatpush1.msra.mxu0 0.0
  %1390 = vmatprep.subr.mxu0 0.0
  %1391 = vmatpush1.msra.mxu0 0.0
  %1392 = vmatprep.subr.mxu0 0.0
  %1393 = vmatpush1.msra.mxu0 0.0
  %1394 = vmatprep.subr.mxu0 0.0
  %1395 = vmatpush1.msra.mxu0 0.0
  %1396 = vmatprep.subr.mxu0 0.0
  %1397 = vmatpush1.msra.mxu0 0.0
  %1398 = vmatprep.subr.mxu0 0.0
  %1399 = vmatpush1.msra.mxu0 0.0
  %1400 = vmatprep.subr.mxu0 0.0
  %1401 = vmatpush1.msra.mxu0 0.0
  %1402 = vmatprep.subr.mxu0 0.0
  %1403 = vmatpush1.msra.mxu0 0.0
  %1404 = vmatprep.subr.mxu0 0.0
  %1405 = vmatpush1.msra.mxu0 0.0
  %1406 = vmatprep.subr.mxu0 0.0
  %1407 = vmatpush1.msra.mxu0 0.0
  %1408 = vmatprep.subr.mxu0 0.0
  %1409 = vmatpush1.msra.mxu0 0.0
  %1410 = vmatprep.subr.mxu0 0.0
  %1411 = vmatpush1.msra.mxu0 0.0
  %1412 = vmatprep.subr.mxu0 0.0
  %1413 = vmatpush1.msra.mxu0 %v36
  %1414 = vmatprep.subr.mxu0 0.0
  %1415 = vmatpush1.msra.mxu0 %v35
  %1416 = vmatprep.subr.mxu0 0.0
  %1417 = vmatpush1.msra.mxu0 %v34
  %1418 = vmatprep.subr.mxu0 0.0
  %1419 = vmatpush1.msra.mxu0 %v33
  %1420 = vmatprep.subr.mxu0 0.0
  %1421 = vmatpush2.msra.mxu0 0.0
  %1422 = vmatprep.subr.mxu0 0.0
  %1423 = vmatpush2.msra.mxu0 0.0
  %1424 = vmatprep.subr.mxu0 0.0
  %1425 = vmatpush2.msra.mxu0 0.0
  %1426 = vmatprep.subr.mxu0 0.0
  %1427 = vmatpush2.msra.mxu0 0.0
  %1428 = vmatprep.subr.mxu0 0.0
  %1429 = vmatpush2.msra.mxu0 0.0
  %1430 = vmatprep.subr.mxu0 0.0
  %1431 = vmatpush2.msra.mxu0 0.0
  %1432 = vmatprep.subr.mxu0 0.0
  %1433 = vmatpush2.msra.mxu0 0.0
  %1434 = vmatprep.subr.mxu0 0.0
  %1435 = vmatpush2.msra.mxu0 0.0
  %1436 = vmatprep.subr.mxu0 0.0
  %1437 = vmatpush2.msra.mxu0 0.0
  %1438 = vmatprep.subr.mxu0 0.0
  %1439 = vmatpush2.msra.mxu0 0.0
  %1440 = vmatprep.subr.mxu0 0.0
  %1441 = vmatpush2.msra.mxu0 0.0
  %1442 = vmatprep.subr.mxu0 0.0
  %1443 = vmatpush2.msra.mxu0 0.0
  %1444 = vmatprep.subr.mxu0 0.0
  %1445 = vmatpush2.msra.mxu0 0.0
  %1446 = vmatprep.subr.mxu0 0.0
  %1447 = vmatpush2.msra.mxu0 0.0
  %1448 = vmatprep.subr.mxu0 0.0
  %1449 = vmatpush2.msra.mxu0 0.0
  %1450 = vmatprep.subr.mxu0 0.0
  %1451 = vmatpush2.msra.mxu0 0.0
  %1452 = vmatprep.mubr.f32.mxu0 0.0
  %1453 = vmatmul.mubr.f32.gmra.mxu0 %v1386
  %v1454 = vpop.f32.mrf.mxu0
  %v1455 = vadd.f32 %v1384, %v1454
  %v1456 = vpop.f32.mrf.mxu0
  %1457 = vdwg.mxu0
  %1459 = vrot.lane.b32.xlu0 %v1455, 32
  %v1460 = vpop.permute.xlu0 %1459
  %v1462 = vsel %vm156, %v1366, %v1460
  %vm1463 = vcmask 359424
  %v1464 = vsel %vm1463, %v1462, 0.0
  %1465 = vst [vmem:[%s3] sm:$0x3] %v1464
  // Predicated region
  $region14: #{lstm_classifier_forward.1} parent=0 // pred_check
    _
  $region15: #{lstm_classifier_forward.1} parent=0 // pred_check_branch
    %1467 = sbr.rel (0) target = $region17
  $region16: #{lstm_classifier_forward.1} parent=0 // pred_region
    _
  $region17: #{lstm_classifier_forward.1} parent=0 // pred_fallthru
    _
  // Predicated region
  $region18: #{lstm_classifier_forward.1} parent=0 // pred_check
    _
  $region19: #{lstm_classifier_forward.1} parent=0 // pred_check_branch
    %1469 = sbr.rel (0) target = $region21
  $region20: #{lstm_classifier_forward.1} parent=0 // pred_region
    _
  $region21: #{lstm_classifier_forward.1} parent=0 // pred_fallthru
    _

</llo_original>
